<compile_context>
chip_gen: v7x
topology: tpu7x:2x2x1
jax: 0.10.0
libtpu: 0.0.40
codegen_flags: <defaults>
</compile_context>

<pallas_src>
import functools

import jax
import jax.numpy as jnp
from jax import lax
from jax.experimental import pallas as pl
from jax.experimental.pallas import tpu as pltpu


# ----------------------------------------------------------------------------
# Fused Pallas kernel: all MHA layers of one stack + final LayerNorm
# ----------------------------------------------------------------------------
def _fused_stack_kernel(x_ref, wqkv_ref, bqkv_ref, wo_ref, bo_ref, g_ref, b_ref,
                        o_ref, *, num_heads, stack_layers):
    """Grid axis 0 (parallel) selects the stack: 0 = paper, 1 = author.

    x_ref    : (T, d)      walk activations (leading stack dim squeezed)
    wqkv_ref : (L, d, 3d)  fused Q|K|V weights, 1/sqrt(hd) folded into Q block
    bqkv_ref : (L, 1, 3d)  fused Q|K|V biases
    wo_ref   : (L, d, d)   output-projection weights
    bo_ref   : (L, 1, d)   output-projection biases
    g_ref/b_ref : (1, d)   LayerNorm affine params
    o_ref    : (T, d)
    """
    d = x_ref.shape[-1]
    hd = d // num_heads

    x = x_ref[...].astype(jnp.float32)                       # (T, d), stays in VMEM

    for l in range(stack_layers):                             # static unroll, L small
        wqkv = wqkv_ref[l]                                    # (d, 3d)
        bqkv = bqkv_ref[l]                                    # (1, 3d)
        wo = wo_ref[l]                                        # (d, d)
        bo = bo_ref[l]                                        # (1, d)

        # One fused QKV projection (single MXU push instead of three).
        qkv = jnp.dot(x, wqkv, preferred_element_type=jnp.float32) + bqkv  # (T, 3d)

        # Per-head attention, accumulated straight through the output
        # projection (no lane-axis concat of head outputs).
        acc = jnp.zeros((x.shape[0], d), jnp.float32)
        for h in range(num_heads):                            # static unroll
            lo = h * hd
            qh = qkv[:, lo:lo + hd]                           # Q already pre-scaled
            kh = qkv[:, d + lo:d + lo + hd]
            vh = qkv[:, 2 * d + lo:2 * d + lo + hd]

            # q @ k^T with the transpose absorbed into the contraction dims.
            s = lax.dot_general(qh, kh, (((1,), (1,)), ((), ())),
                                preferred_element_type=jnp.float32)        # (T, T)
            s = s - jnp.max(s, axis=-1, keepdims=True)
            p = jnp.exp(s)
            denom = jnp.sum(p, axis=-1, keepdims=True)
            p = p * pl.reciprocal(denom, approx=True)         # EUP, not VALU divide
            head = jnp.dot(p, vh, preferred_element_type=jnp.float32)      # (T, hd)

            # Sublane (8-aligned) row-slice of wo; accumulate via the MXU.
            acc = acc + jnp.dot(head, wo[lo:lo + hd, :],
                                preferred_element_type=jnp.float32)        # (T, d)
        x = acc + bo

    # Final LayerNorm over the embedding dim (eps = 1e-5, PyTorch default).
    mu = jnp.mean(x, axis=-1, keepdims=True)
    var = jnp.mean((x - mu) ** 2, axis=-1, keepdims=True)
    inv = lax.rsqrt(var + 1e-5)
    o_ref[...] = ((x - mu) * inv * g_ref[...] + b_ref[...]).astype(o_ref.dtype)


# ----------------------------------------------------------------------------
# Pallas wrapper: both stacks in one launch, grid=(2,) over the stack axis
# ----------------------------------------------------------------------------
def fused_walk_stacks(x2, params, *, num_heads, stack_layers):
    """x2: (2, T, d) — [paper_walk, author_walk]."""
    S, T, d = x2.shape
    L = stack_layers
    kernel = functools.partial(_fused_stack_kernel,
                               num_heads=num_heads, stack_layers=stack_layers)
    # Whole (T, d) walk fits in VMEM at these sizes; no inner tiling needed.
    # TODO(synk): at realistic sizes (T >= 128, d >= 128) re-tile with a real
    # grid over T and re-derive the VMEM budget (64 MiB on v7x).
    return pl.pallas_call(
        kernel,
        out_shape=jax.ShapeDtypeStruct((S, T, d), x2.dtype),
        grid=(S,),
        in_specs=[
            pl.BlockSpec((None, T, d), lambda s: (s, 0, 0)),
            pl.BlockSpec((None, L, d, 3 * d), lambda s: (s, 0, 0, 0)),
            pl.BlockSpec((None, L, 1, 3 * d), lambda s: (s, 0, 0, 0)),
            pl.BlockSpec((None, L, d, d), lambda s: (s, 0, 0, 0)),
            pl.BlockSpec((None, L, 1, d), lambda s: (s, 0, 0, 0)),
            pl.BlockSpec((None, 1, d), lambda s: (s, 0, 0)),
            pl.BlockSpec((None, 1, d), lambda s: (s, 0, 0)),
        ],
        out_specs=pl.BlockSpec((None, T, d), lambda s: (s, 0, 0)),
        compiler_params=pltpu.CompilerParams(
            dimension_semantics=("parallel",)),   # v7x: one stack per TensorCore
    )(x2, params["wqkv"], params["bqkv"], params["wo"], params["bo"],
      params["ln_g"], params["ln_b"])


# ----------------------------------------------------------------------------
# Parameter init (deterministic, synthetic — mirrors the module's __init__)
# ----------------------------------------------------------------------------
def init_params(key, embed_dim, stack_layers, num_heads):
    d = embed_dim
    hd = d // num_heads
    scale = 1.0 / (hd ** 0.5)

    def one_stack(k):
        wqkv_l, bqkv_l, wo_l, bo_l = [], [], [], []
        ks = jax.random.split(k, 4 * stack_layers)
        for l in range(stack_layers):
            wq = jax.random.normal(ks[4 * l + 0], (d, d), jnp.float32) * 0.1
            wk = jax.random.normal(ks[4 * l + 1], (d, d), jnp.float32) * 0.1
            wv = jax.random.normal(ks[4 * l + 2], (d, d), jnp.float32) * 0.1
            wo = jax.random.normal(ks[4 * l + 3], (d, d), jnp.float32) * 0.1
            bq = jnp.zeros((1, d), jnp.float32)
            bk = jnp.zeros((1, d), jnp.float32)
            bv = jnp.zeros((1, d), jnp.float32)
            bo = jnp.zeros((1, d), jnp.float32)
            # Fold the 1/sqrt(head_dim) attention scale into the Q projection.
            wqkv_l.append(jnp.concatenate([wq * scale, wk, wv], axis=1))     # (d, 3d)
            bqkv_l.append(jnp.concatenate([bq * scale, bk, bv], axis=1))     # (1, 3d)
            wo_l.append(wo)
            bo_l.append(bo)
        return (jnp.stack(wqkv_l), jnp.stack(bqkv_l),
                jnp.stack(wo_l), jnp.stack(bo_l))

    k_paper, k_author = jax.random.split(key)
    p = one_stack(k_paper)
    a = one_stack(k_author)
    return {
        "wqkv": jnp.stack([p[0], a[0]]),   # (2, L, d, 3d)
        "bqkv": jnp.stack([p[1], a[1]]),   # (2, L, 1, 3d)
        "wo":   jnp.stack([p[2], a[2]]),   # (2, L, d, d)
        "bo":   jnp.stack([p[3], a[3]]),   # (2, L, 1, d)
        "ln_g": jnp.ones((2, 1, d), jnp.float32),   # [paper_ln, author_ln]
        "ln_b": jnp.zeros((2, 1, d), jnp.float32),
    }


# ----------------------------------------------------------------------------
# RandomWalk.forward (module_type == 'attention')
# Embedding tables are donated so the row scatter is done in place.
# ----------------------------------------------------------------------------
@functools.partial(jax.jit, static_argnames=("num_heads", "stack_layers"),
                   donate_argnums=(0, 1))
def random_walk_forward(author_embedding, paper_embedding,
                        author_selected_idx, paper_selected_idx,
                        params, *, num_heads, stack_layers):
    """author_embedding (N, d), paper_embedding (M, d),
    author_selected_idx / paper_selected_idx (T, 1) int32."""
    a_idx = author_selected_idx[:, 0]
    p_idx = paper_selected_idx[:, 0]

    # gather(0, idx.repeat(1, d)) == row gather
    paper_sel = paper_embedding[p_idx]      # (T, d)
    author_sel = author_embedding[a_idx]    # (T, d)

    x2 = jnp.stack([paper_sel, author_sel])                     # (2, T, d)
    y2 = fused_walk_stacks(x2, params, num_heads=num_heads,
                           stack_layers=stack_layers)
    paper_out, author_out = y2[0], y2[1]

    # scatter(0, idx.repeat(1, d), rows) == row scatter (in place, donated)
    output_author_embedding = author_embedding.at[a_idx].set(author_out)
    output_paper_embedding = paper_embedding.at[p_idx].set(paper_out)
    return output_author_embedding, output_paper_embedding


# TODO(synk): the LSTM branch (module_type == 'lstm') is not implemented;
# only the attention branch of the module is kernelized here.


# ----------------------------------------------------------------------------
# Pure-JAX reference (for correctness check against the fused kernel)
# ----------------------------------------------------------------------------
def _reference_stack(x, wqkv, bqkv, wo, bo, g, b, num_heads):
    L, d = wqkv.shape[0], x.shape[-1]
    hd = d // num_heads
    for l in range(L):
        qkv = x @ wqkv[l] + bqkv[l]          # Q already scaled at init
        q, k, v = qkv[:, :d], qkv[:, d:2 * d], qkv[:, 2 * d:]
        heads = []
        for h in range(num_heads):
            sl = slice(h * hd, (h + 1) * hd)
            s = q[:, sl] @ k[:, sl].T
            p = jax.nn.softmax(s, axis=-1)
            heads.append(p @ v[:, sl])
        x = jnp.concatenate(heads, axis=-1) @ wo[l] + bo[l]
    mu = x.mean(-1, keepdims=True)
    var = ((x - mu) ** 2).mean(-1, keepdims=True)
    return (x - mu) / jnp.sqrt(var + 1e-5) * g + b


if __name__ == "__main__":
    embed_dim = 32
    stack_layers = 2
    num_heads = 4
    N = 16   # number of authors
    M = 12   # number of papers
    T = 8    # random-walk length

    key = jax.random.PRNGKey(0)
    k_auth, k_pap, k_params = jax.random.split(key, 3)

    author_embedding = jax.random.normal(k_auth, (N, embed_dim), jnp.float32)
    paper_embedding = jax.random.normal(k_pap, (M, embed_dim), jnp.float32)
    # Distinct indices: scatter with duplicates is order-dependent in torch too
    # (documented precondition of this demo).
    author_selected_idx = jnp.arange(T, dtype=jnp.int32).reshape(T, 1)
    paper_selected_idx = (jnp.arange(T, dtype=jnp.int32)[::-1]).reshape(T, 1)

    params = init_params(k_params, embed_dim, stack_layers, num_heads)

    # Reference computed (and materialized) BEFORE the donating call consumes
    # the embedding-table buffers.
    a_idx = author_selected_idx[:, 0]
    p_idx = paper_selected_idx[:, 0]
    ref_paper_rows = _reference_stack(
        paper_embedding[p_idx], params["wqkv"][0], params["bqkv"][0],
        params["wo"][0], params["bo"][0], params["ln_g"][0], params["ln_b"][0],
        num_heads)
    ref_author_rows = _reference_stack(
        author_embedding[a_idx], params["wqkv"][1], params["bqkv"][1],
        params["wo"][1], params["bo"][1], params["ln_g"][1], params["ln_b"][1],
        num_heads)
    ref_author = author_embedding.at[a_idx].set(ref_author_rows)
    ref_paper = paper_embedding.at[p_idx].set(ref_paper_rows)
    jax.block_until_ready((ref_author, ref_paper))

    out_author, out_paper = random_walk_forward(
        author_embedding, paper_embedding,
        author_selected_idx, paper_selected_idx,
        params, num_heads=num_heads, stack_layers=stack_layers)
    jax.block_until_ready((out_author, out_paper))

    assert out_author.shape == (N, embed_dim)
    assert out_paper.shape == (M, embed_dim)
    assert jnp.allclose(out_author, ref_author, atol=1e-2, rtol=1e-2)
    assert jnp.allclose(out_paper, ref_paper, atol=1e-2, rtol=1e-2)
    print("KERNEL_OK")
</pallas_src>

<mosaic_0001>
module attributes {stable_mosaic.version = 11 : i64} {
  func.func @_fused_stack_kernel(%arg0: i32, %arg1: memref<1x8x32xf32, #tpu.memory_space<vmem>>, %arg2: memref<1x2x32x96xf32, #tpu.memory_space<vmem>>, %arg3: memref<1x2x1x96xf32, #tpu.memory_space<vmem>>, %arg4: memref<1x2x32x32xf32, #tpu.memory_space<vmem>>, %arg5: memref<1x2x1x32xf32, #tpu.memory_space<vmem>>, %arg6: memref<1x1x32xf32, #tpu.memory_space<vmem>>, %arg7: memref<1x1x32xf32, #tpu.memory_space<vmem>>, %arg8: memref<1x8x32xf32, #tpu.memory_space<vmem>>) attributes {dimension_semantics = [#tpu.dimension_semantics<parallel>], iteration_bounds = array<i64: 2>, scalar_prefetch = 0 : i64, scratch_operands = 0 : i64, tpu.core_type = #tpu.core_type<tc>, window_params = [{transform_indices = @transform_0, window_bounds = array<i64: 1, 8, 32>}, {transform_indices = @transform_1, window_bounds = array<i64: 1, 2, 32, 96>}, {transform_indices = @transform_2, window_bounds = array<i64: 1, 2, 1, 96>}, {transform_indices = @transform_3, window_bounds = array<i64: 1, 2, 32, 32>}, {transform_indices = @transform_4, window_bounds = array<i64: 1, 2, 1, 32>}, {transform_indices = @transform_5, window_bounds = array<i64: 1, 1, 32>}, {transform_indices = @transform_6, window_bounds = array<i64: 1, 1, 32>}, {transform_indices = @transform_7, window_bounds = array<i64: 1, 8, 32>}]} {
    %c0 = arith.constant 0 : index
    %c0_0 = arith.constant 0 : index
    %c0_1 = arith.constant 0 : index
    %0 = vector.load %arg1[%c0, %c0_0, %c0_1] : memref<1x8x32xf32, #tpu.memory_space<vmem>>, vector<1x8x32xf32>
    %1 = vector.shape_cast %0 : vector<1x8x32xf32> to vector<8x32xf32>
    %c0_2 = arith.constant 0 : index
    %c0_3 = arith.constant 0 : index
    %c0_4 = arith.constant 0 : index
    %c0_5 = arith.constant 0 : index
    %2 = vector.load %arg2[%c0_2, %c0_3, %c0_4, %c0_5] : memref<1x2x32x96xf32, #tpu.memory_space<vmem>>, vector<1x1x32x96xf32>
    %3 = vector.shape_cast %2 : vector<1x1x32x96xf32> to vector<32x96xf32>
    %c0_6 = arith.constant 0 : index
    %c0_7 = arith.constant 0 : index
    %c0_8 = arith.constant 0 : index
    %c0_9 = arith.constant 0 : index
    %4 = vector.load %arg3[%c0_6, %c0_7, %c0_8, %c0_9] : memref<1x2x1x96xf32, #tpu.memory_space<vmem>>, vector<1x1x1x96xf32>
    %5 = vector.shape_cast %4 : vector<1x1x1x96xf32> to vector<1x96xf32>
    %c0_10 = arith.constant 0 : index
    %c0_11 = arith.constant 0 : index
    %c0_12 = arith.constant 0 : index
    %c0_13 = arith.constant 0 : index
    %6 = vector.load %arg4[%c0_10, %c0_11, %c0_12, %c0_13] : memref<1x2x32x32xf32, #tpu.memory_space<vmem>>, vector<1x1x32x32xf32>
    %7 = vector.shape_cast %6 : vector<1x1x32x32xf32> to vector<32x32xf32>
    %c0_14 = arith.constant 0 : index
    %c0_15 = arith.constant 0 : index
    %c0_16 = arith.constant 0 : index
    %c0_17 = arith.constant 0 : index
    %8 = vector.load %arg5[%c0_14, %c0_15, %c0_16, %c0_17] : memref<1x2x1x32xf32, #tpu.memory_space<vmem>>, vector<1x1x1x32xf32>
    %9 = vector.shape_cast %8 : vector<1x1x1x32xf32> to vector<1x32xf32>
    %cst = arith.constant dense<0.000000e+00> : vector<8x96xf32>
    %10 = tpu.matmul %1, %3, %cst {dimension_numbers = #tpu.dot_dimension_numbers<[1], [0], [0], [1], [0, 0, 1, 1], [], []>} : vector<8x32xf32>, vector<32x96xf32>, vector<8x96xf32> -> vector<8x96xf32>
    %11 = vector.broadcast %5 : vector<1x96xf32> to vector<8x96xf32>
    %12 = arith.addf %10, %11 : vector<8x96xf32>
    %cst_18 = arith.constant 0.000000e+00 : f32
    %13 = vector.broadcast %cst_18 : f32 to vector<8x32xf32>
    %14 = vector.extract_strided_slice %12 {offsets = [0, 0], sizes = [8, 8], strides = [1, 1]} : vector<8x96xf32> to vector<8x8xf32>
    %15 = vector.extract_strided_slice %12 {offsets = [0, 32], sizes = [8, 8], strides = [1, 1]} : vector<8x96xf32> to vector<8x8xf32>
    %16 = vector.extract_strided_slice %12 {offsets = [0, 64], sizes = [8, 8], strides = [1, 1]} : vector<8x96xf32> to vector<8x8xf32>
    %cst_19 = arith.constant dense<0.000000e+00> : vector<8x8xf32>
    %17 = tpu.matmul %14, %15, %cst_19 {dimension_numbers = #tpu.dot_dimension_numbers<[1], [1], [0], [0], [0, 0, 1, 0], [], []>} : vector<8x8xf32>, vector<8x8xf32>, vector<8x8xf32> -> vector<8x8xf32>
    %cst_20 = arith.constant dense<0xFF800000> : vector<8xf32>
    %18 = vector.multi_reduction <maximumf>, %17, %cst_20 [1] : vector<8x8xf32> to vector<8xf32>
    %19 = vector.shape_cast %18 : vector<8xf32> to vector<8x1xf32>
    %20 = vector.broadcast %19 : vector<8x1xf32> to vector<8x8xf32>
    %21 = arith.subf %17, %20 : vector<8x8xf32>
    %22 = math.exp %21 : vector<8x8xf32>
    %cst_21 = arith.constant dense<0.000000e+00> : vector<8xf32>
    %23 = vector.multi_reduction <add>, %22, %cst_21 [1] : vector<8x8xf32> to vector<8xf32>
    %24 = vector.shape_cast %23 : vector<8xf32> to vector<8x1xf32>
    %25 = tpu.reciprocal %24 {approx = true} : vector<8x1xf32> -> vector<8x1xf32>
    %26 = vector.broadcast %25 : vector<8x1xf32> to vector<8x8xf32>
    %27 = arith.mulf %22, %26 : vector<8x8xf32>
    %cst_22 = arith.constant dense<0.000000e+00> : vector<8x8xf32>
    %28 = tpu.matmul %27, %16, %cst_22 {dimension_numbers = #tpu.dot_dimension_numbers<[1], [0], [0], [1], [0, 0, 1, 1], [], []>} : vector<8x8xf32>, vector<8x8xf32>, vector<8x8xf32> -> vector<8x8xf32>
    %29 = vector.extract_strided_slice %7 {offsets = [0, 0], sizes = [8, 32], strides = [1, 1]} : vector<32x32xf32> to vector<8x32xf32>
    %cst_23 = arith.constant dense<0.000000e+00> : vector<8x32xf32>
    %30 = tpu.matmul %28, %29, %cst_23 {dimension_numbers = #tpu.dot_dimension_numbers<[1], [0], [0], [1], [0, 0, 1, 1], [], []>} : vector<8x8xf32>, vector<8x32xf32>, vector<8x32xf32> -> vector<8x32xf32>
    %31 = arith.addf %13, %30 : vector<8x32xf32>
    %32 = vector.extract_strided_slice %12 {offsets = [0, 8], sizes = [8, 8], strides = [1, 1]} : vector<8x96xf32> to vector<8x8xf32>
    %33 = vector.extract_strided_slice %12 {offsets = [0, 40], sizes = [8, 8], strides = [1, 1]} : vector<8x96xf32> to vector<8x8xf32>
    %34 = vector.extract_strided_slice %12 {offsets = [0, 72], sizes = [8, 8], strides = [1, 1]} : vector<8x96xf32> to vector<8x8xf32>
    %cst_24 = arith.constant dense<0.000000e+00> : vector<8x8xf32>
    %35 = tpu.matmul %32, %33, %cst_24 {dimension_numbers = #tpu.dot_dimension_numbers<[1], [1], [0], [0], [0, 0, 1, 0], [], []>} : vector<8x8xf32>, vector<8x8xf32>, vector<8x8xf32> -> vector<8x8xf32>
    %cst_25 = arith.constant dense<0xFF800000> : vector<8xf32>
    %36 = vector.multi_reduction <maximumf>, %35, %cst_25 [1] : vector<8x8xf32> to vector<8xf32>
    %37 = vector.shape_cast %36 : vector<8xf32> to vector<8x1xf32>
    %38 = vector.broadcast %37 : vector<8x1xf32> to vector<8x8xf32>
    %39 = arith.subf %35, %38 : vector<8x8xf32>
    %40 = math.exp %39 : vector<8x8xf32>
    %cst_26 = arith.constant dense<0.000000e+00> : vector<8xf32>
    %41 = vector.multi_reduction <add>, %40, %cst_26 [1] : vector<8x8xf32> to vector<8xf32>
    %42 = vector.shape_cast %41 : vector<8xf32> to vector<8x1xf32>
    %43 = tpu.reciprocal %42 {approx = true} : vector<8x1xf32> -> vector<8x1xf32>
    %44 = vector.broadcast %43 : vector<8x1xf32> to vector<8x8xf32>
    %45 = arith.mulf %40, %44 : vector<8x8xf32>
    %cst_27 = arith.constant dense<0.000000e+00> : vector<8x8xf32>
    %46 = tpu.matmul %45, %34, %cst_27 {dimension_numbers = #tpu.dot_dimension_numbers<[1], [0], [0], [1], [0, 0, 1, 1], [], []>} : vector<8x8xf32>, vector<8x8xf32>, vector<8x8xf32> -> vector<8x8xf32>
    %47 = vector.extract_strided_slice %7 {offsets = [8, 0], sizes = [8, 32], strides = [1, 1]} : vector<32x32xf32> to vector<8x32xf32>
    %cst_28 = arith.constant dense<0.000000e+00> : vector<8x32xf32>
    %48 = tpu.matmul %46, %47, %cst_28 {dimension_numbers = #tpu.dot_dimension_numbers<[1], [0], [0], [1], [0, 0, 1, 1], [], []>} : vector<8x8xf32>, vector<8x32xf32>, vector<8x32xf32> -> vector<8x32xf32>
    %49 = arith.addf %31, %48 : vector<8x32xf32>
    %50 = vector.extract_strided_slice %12 {offsets = [0, 16], sizes = [8, 8], strides = [1, 1]} : vector<8x96xf32> to vector<8x8xf32>
    %51 = vector.extract_strided_slice %12 {offsets = [0, 48], sizes = [8, 8], strides = [1, 1]} : vector<8x96xf32> to vector<8x8xf32>
    %52 = vector.extract_strided_slice %12 {offsets = [0, 80], sizes = [8, 8], strides = [1, 1]} : vector<8x96xf32> to vector<8x8xf32>
    %cst_29 = arith.constant dense<0.000000e+00> : vector<8x8xf32>
    %53 = tpu.matmul %50, %51, %cst_29 {dimension_numbers = #tpu.dot_dimension_numbers<[1], [1], [0], [0], [0, 0, 1, 0], [], []>} : vector<8x8xf32>, vector<8x8xf32>, vector<8x8xf32> -> vector<8x8xf32>
    %cst_30 = arith.constant dense<0xFF800000> : vector<8xf32>
    %54 = vector.multi_reduction <maximumf>, %53, %cst_30 [1] : vector<8x8xf32> to vector<8xf32>
    %55 = vector.shape_cast %54 : vector<8xf32> to vector<8x1xf32>
    %56 = vector.broadcast %55 : vector<8x1xf32> to vector<8x8xf32>
    %57 = arith.subf %53, %56 : vector<8x8xf32>
    %58 = math.exp %57 : vector<8x8xf32>
    %cst_31 = arith.constant dense<0.000000e+00> : vector<8xf32>
    %59 = vector.multi_reduction <add>, %58, %cst_31 [1] : vector<8x8xf32> to vector<8xf32>
    %60 = vector.shape_cast %59 : vector<8xf32> to vector<8x1xf32>
    %61 = tpu.reciprocal %60 {approx = true} : vector<8x1xf32> -> vector<8x1xf32>
    %62 = vector.broadcast %61 : vector<8x1xf32> to vector<8x8xf32>
    %63 = arith.mulf %58, %62 : vector<8x8xf32>
    %cst_32 = arith.constant dense<0.000000e+00> : vector<8x8xf32>
    %64 = tpu.matmul %63, %52, %cst_32 {dimension_numbers = #tpu.dot_dimension_numbers<[1], [0], [0], [1], [0, 0, 1, 1], [], []>} : vector<8x8xf32>, vector<8x8xf32>, vector<8x8xf32> -> vector<8x8xf32>
    %65 = vector.extract_strided_slice %7 {offsets = [16, 0], sizes = [8, 32], strides = [1, 1]} : vector<32x32xf32> to vector<8x32xf32>
    %cst_33 = arith.constant dense<0.000000e+00> : vector<8x32xf32>
    %66 = tpu.matmul %64, %65, %cst_33 {dimension_numbers = #tpu.dot_dimension_numbers<[1], [0], [0], [1], [0, 0, 1, 1], [], []>} : vector<8x8xf32>, vector<8x32xf32>, vector<8x32xf32> -> vector<8x32xf32>
    %67 = arith.addf %49, %66 : vector<8x32xf32>
    %68 = vector.extract_strided_slice %12 {offsets = [0, 24], sizes = [8, 8], strides = [1, 1]} : vector<8x96xf32> to vector<8x8xf32>
    %69 = vector.extract_strided_slice %12 {offsets = [0, 56], sizes = [8, 8], strides = [1, 1]} : vector<8x96xf32> to vector<8x8xf32>
    %70 = vector.extract_strided_slice %12 {offsets = [0, 88], sizes = [8, 8], strides = [1, 1]} : vector<8x96xf32> to vector<8x8xf32>
    %cst_34 = arith.constant dense<0.000000e+00> : vector<8x8xf32>
    %71 = tpu.matmul %68, %69, %cst_34 {dimension_numbers = #tpu.dot_dimension_numbers<[1], [1], [0], [0], [0, 0, 1, 0], [], []>} : vector<8x8xf32>, vector<8x8xf32>, vector<8x8xf32> -> vector<8x8xf32>
    %cst_35 = arith.constant dense<0xFF800000> : vector<8xf32>
    %72 = vector.multi_reduction <maximumf>, %71, %cst_35 [1] : vector<8x8xf32> to vector<8xf32>
    %73 = vector.shape_cast %72 : vector<8xf32> to vector<8x1xf32>
    %74 = vector.broadcast %73 : vector<8x1xf32> to vector<8x8xf32>
    %75 = arith.subf %71, %74 : vector<8x8xf32>
    %76 = math.exp %75 : vector<8x8xf32>
    %cst_36 = arith.constant dense<0.000000e+00> : vector<8xf32>
    %77 = vector.multi_reduction <add>, %76, %cst_36 [1] : vector<8x8xf32> to vector<8xf32>
    %78 = vector.shape_cast %77 : vector<8xf32> to vector<8x1xf32>
    %79 = tpu.reciprocal %78 {approx = true} : vector<8x1xf32> -> vector<8x1xf32>
    %80 = vector.broadcast %79 : vector<8x1xf32> to vector<8x8xf32>
    %81 = arith.mulf %76, %80 : vector<8x8xf32>
    %cst_37 = arith.constant dense<0.000000e+00> : vector<8x8xf32>
    %82 = tpu.matmul %81, %70, %cst_37 {dimension_numbers = #tpu.dot_dimension_numbers<[1], [0], [0], [1], [0, 0, 1, 1], [], []>} : vector<8x8xf32>, vector<8x8xf32>, vector<8x8xf32> -> vector<8x8xf32>
    %83 = vector.extract_strided_slice %7 {offsets = [24, 0], sizes = [8, 32], strides = [1, 1]} : vector<32x32xf32> to vector<8x32xf32>
    %cst_38 = arith.constant dense<0.000000e+00> : vector<8x32xf32>
    %84 = tpu.matmul %82, %83, %cst_38 {dimension_numbers = #tpu.dot_dimension_numbers<[1], [0], [0], [1], [0, 0, 1, 1], [], []>} : vector<8x8xf32>, vector<8x32xf32>, vector<8x32xf32> -> vector<8x32xf32>
    %85 = arith.addf %67, %84 : vector<8x32xf32>
    %86 = vector.broadcast %9 : vector<1x32xf32> to vector<8x32xf32>
    %87 = arith.addf %85, %86 : vector<8x32xf32>
    %c0_39 = arith.constant 0 : index
    %c1 = arith.constant 1 : index
    %c0_40 = arith.constant 0 : index
    %c0_41 = arith.constant 0 : index
    %88 = vector.load %arg2[%c0_39, %c1, %c0_40, %c0_41] : memref<1x2x32x96xf32, #tpu.memory_space<vmem>>, vector<1x1x32x96xf32>
    %89 = vector.shape_cast %88 : vector<1x1x32x96xf32> to vector<32x96xf32>
    %c0_42 = arith.constant 0 : index
    %c1_43 = arith.constant 1 : index
    %c0_44 = arith.constant 0 : index
    %c0_45 = arith.constant 0 : index
    %90 = vector.load %arg3[%c0_42, %c1_43, %c0_44, %c0_45] : memref<1x2x1x96xf32, #tpu.memory_space<vmem>>, vector<1x1x1x96xf32>
    %91 = vector.shape_cast %90 : vector<1x1x1x96xf32> to vector<1x96xf32>
    %c0_46 = arith.constant 0 : index
    %c1_47 = arith.constant 1 : index
    %c0_48 = arith.constant 0 : index
    %c0_49 = arith.constant 0 : index
    %92 = vector.load %arg4[%c0_46, %c1_47, %c0_48, %c0_49] : memref<1x2x32x32xf32, #tpu.memory_space<vmem>>, vector<1x1x32x32xf32>
    %93 = vector.shape_cast %92 : vector<1x1x32x32xf32> to vector<32x32xf32>
    %c0_50 = arith.constant 0 : index
    %c1_51 = arith.constant 1 : index
    %c0_52 = arith.constant 0 : index
    %c0_53 = arith.constant 0 : index
    %94 = vector.load %arg5[%c0_50, %c1_51, %c0_52, %c0_53] : memref<1x2x1x32xf32, #tpu.memory_space<vmem>>, vector<1x1x1x32xf32>
    %95 = vector.shape_cast %94 : vector<1x1x1x32xf32> to vector<1x32xf32>
    %cst_54 = arith.constant dense<0.000000e+00> : vector<8x96xf32>
    %96 = tpu.matmul %87, %89, %cst_54 {dimension_numbers = #tpu.dot_dimension_numbers<[1], [0], [0], [1], [0, 0, 1, 1], [], []>} : vector<8x32xf32>, vector<32x96xf32>, vector<8x96xf32> -> vector<8x96xf32>
    %97 = vector.broadcast %91 : vector<1x96xf32> to vector<8x96xf32>
    %98 = arith.addf %96, %97 : vector<8x96xf32>
    %cst_55 = arith.constant 0.000000e+00 : f32
    %99 = vector.broadcast %cst_55 : f32 to vector<8x32xf32>
    %100 = vector.extract_strided_slice %98 {offsets = [0, 0], sizes = [8, 8], strides = [1, 1]} : vector<8x96xf32> to vector<8x8xf32>
    %101 = vector.extract_strided_slice %98 {offsets = [0, 32], sizes = [8, 8], strides = [1, 1]} : vector<8x96xf32> to vector<8x8xf32>
    %102 = vector.extract_strided_slice %98 {offsets = [0, 64], sizes = [8, 8], strides = [1, 1]} : vector<8x96xf32> to vector<8x8xf32>
    %cst_56 = arith.constant dense<0.000000e+00> : vector<8x8xf32>
    %103 = tpu.matmul %100, %101, %cst_56 {dimension_numbers = #tpu.dot_dimension_numbers<[1], [1], [0], [0], [0, 0, 1, 0], [], []>} : vector<8x8xf32>, vector<8x8xf32>, vector<8x8xf32> -> vector<8x8xf32>
    %cst_57 = arith.constant dense<0xFF800000> : vector<8xf32>
    %104 = vector.multi_reduction <maximumf>, %103, %cst_57 [1] : vector<8x8xf32> to vector<8xf32>
    %105 = vector.shape_cast %104 : vector<8xf32> to vector<8x1xf32>
    %106 = vector.broadcast %105 : vector<8x1xf32> to vector<8x8xf32>
    %107 = arith.subf %103, %106 : vector<8x8xf32>
    %108 = math.exp %107 : vector<8x8xf32>
    %cst_58 = arith.constant dense<0.000000e+00> : vector<8xf32>
    %109 = vector.multi_reduction <add>, %108, %cst_58 [1] : vector<8x8xf32> to vector<8xf32>
    %110 = vector.shape_cast %109 : vector<8xf32> to vector<8x1xf32>
    %111 = tpu.reciprocal %110 {approx = true} : vector<8x1xf32> -> vector<8x1xf32>
    %112 = vector.broadcast %111 : vector<8x1xf32> to vector<8x8xf32>
    %113 = arith.mulf %108, %112 : vector<8x8xf32>
    %cst_59 = arith.constant dense<0.000000e+00> : vector<8x8xf32>
    %114 = tpu.matmul %113, %102, %cst_59 {dimension_numbers = #tpu.dot_dimension_numbers<[1], [0], [0], [1], [0, 0, 1, 1], [], []>} : vector<8x8xf32>, vector<8x8xf32>, vector<8x8xf32> -> vector<8x8xf32>
    %115 = vector.extract_strided_slice %93 {offsets = [0, 0], sizes = [8, 32], strides = [1, 1]} : vector<32x32xf32> to vector<8x32xf32>
    %cst_60 = arith.constant dense<0.000000e+00> : vector<8x32xf32>
    %116 = tpu.matmul %114, %115, %cst_60 {dimension_numbers = #tpu.dot_dimension_numbers<[1], [0], [0], [1], [0, 0, 1, 1], [], []>} : vector<8x8xf32>, vector<8x32xf32>, vector<8x32xf32> -> vector<8x32xf32>
    %117 = arith.addf %99, %116 : vector<8x32xf32>
    %118 = vector.extract_strided_slice %98 {offsets = [0, 8], sizes = [8, 8], strides = [1, 1]} : vector<8x96xf32> to vector<8x8xf32>
    %119 = vector.extract_strided_slice %98 {offsets = [0, 40], sizes = [8, 8], strides = [1, 1]} : vector<8x96xf32> to vector<8x8xf32>
    %120 = vector.extract_strided_slice %98 {offsets = [0, 72], sizes = [8, 8], strides = [1, 1]} : vector<8x96xf32> to vector<8x8xf32>
    %cst_61 = arith.constant dense<0.000000e+00> : vector<8x8xf32>
    %121 = tpu.matmul %118, %119, %cst_61 {dimension_numbers = #tpu.dot_dimension_numbers<[1], [1], [0], [0], [0, 0, 1, 0], [], []>} : vector<8x8xf32>, vector<8x8xf32>, vector<8x8xf32> -> vector<8x8xf32>
    %cst_62 = arith.constant dense<0xFF800000> : vector<8xf32>
    %122 = vector.multi_reduction <maximumf>, %121, %cst_62 [1] : vector<8x8xf32> to vector<8xf32>
    %123 = vector.shape_cast %122 : vector<8xf32> to vector<8x1xf32>
    %124 = vector.broadcast %123 : vector<8x1xf32> to vector<8x8xf32>
    %125 = arith.subf %121, %124 : vector<8x8xf32>
    %126 = math.exp %125 : vector<8x8xf32>
    %cst_63 = arith.constant dense<0.000000e+00> : vector<8xf32>
    %127 = vector.multi_reduction <add>, %126, %cst_63 [1] : vector<8x8xf32> to vector<8xf32>
    %128 = vector.shape_cast %127 : vector<8xf32> to vector<8x1xf32>
    %129 = tpu.reciprocal %128 {approx = true} : vector<8x1xf32> -> vector<8x1xf32>
    %130 = vector.broadcast %129 : vector<8x1xf32> to vector<8x8xf32>
    %131 = arith.mulf %126, %130 : vector<8x8xf32>
    %cst_64 = arith.constant dense<0.000000e+00> : vector<8x8xf32>
    %132 = tpu.matmul %131, %120, %cst_64 {dimension_numbers = #tpu.dot_dimension_numbers<[1], [0], [0], [1], [0, 0, 1, 1], [], []>} : vector<8x8xf32>, vector<8x8xf32>, vector<8x8xf32> -> vector<8x8xf32>
    %133 = vector.extract_strided_slice %93 {offsets = [8, 0], sizes = [8, 32], strides = [1, 1]} : vector<32x32xf32> to vector<8x32xf32>
    %cst_65 = arith.constant dense<0.000000e+00> : vector<8x32xf32>
    %134 = tpu.matmul %132, %133, %cst_65 {dimension_numbers = #tpu.dot_dimension_numbers<[1], [0], [0], [1], [0, 0, 1, 1], [], []>} : vector<8x8xf32>, vector<8x32xf32>, vector<8x32xf32> -> vector<8x32xf32>
    %135 = arith.addf %117, %134 : vector<8x32xf32>
    %136 = vector.extract_strided_slice %98 {offsets = [0, 16], sizes = [8, 8], strides = [1, 1]} : vector<8x96xf32> to vector<8x8xf32>
    %137 = vector.extract_strided_slice %98 {offsets = [0, 48], sizes = [8, 8], strides = [1, 1]} : vector<8x96xf32> to vector<8x8xf32>
    %138 = vector.extract_strided_slice %98 {offsets = [0, 80], sizes = [8, 8], strides = [1, 1]} : vector<8x96xf32> to vector<8x8xf32>
    %cst_66 = arith.constant dense<0.000000e+00> : vector<8x8xf32>
    %139 = tpu.matmul %136, %137, %cst_66 {dimension_numbers = #tpu.dot_dimension_numbers<[1], [1], [0], [0], [0, 0, 1, 0], [], []>} : vector<8x8xf32>, vector<8x8xf32>, vector<8x8xf32> -> vector<8x8xf32>
    %cst_67 = arith.constant dense<0xFF800000> : vector<8xf32>
    %140 = vector.multi_reduction <maximumf>, %139, %cst_67 [1] : vector<8x8xf32> to vector<8xf32>
    %141 = vector.shape_cast %140 : vector<8xf32> to vector<8x1xf32>
    %142 = vector.broadcast %141 : vector<8x1xf32> to vector<8x8xf32>
    %143 = arith.subf %139, %142 : vector<8x8xf32>
    %144 = math.exp %143 : vector<8x8xf32>
    %cst_68 = arith.constant dense<0.000000e+00> : vector<8xf32>
    %145 = vector.multi_reduction <add>, %144, %cst_68 [1] : vector<8x8xf32> to vector<8xf32>
    %146 = vector.shape_cast %145 : vector<8xf32> to vector<8x1xf32>
    %147 = tpu.reciprocal %146 {approx = true} : vector<8x1xf32> -> vector<8x1xf32>
    %148 = vector.broadcast %147 : vector<8x1xf32> to vector<8x8xf32>
    %149 = arith.mulf %144, %148 : vector<8x8xf32>
    %cst_69 = arith.constant dense<0.000000e+00> : vector<8x8xf32>
    %150 = tpu.matmul %149, %138, %cst_69 {dimension_numbers = #tpu.dot_dimension_numbers<[1], [0], [0], [1], [0, 0, 1, 1], [], []>} : vector<8x8xf32>, vector<8x8xf32>, vector<8x8xf32> -> vector<8x8xf32>
    %151 = vector.extract_strided_slice %93 {offsets = [16, 0], sizes = [8, 32], strides = [1, 1]} : vector<32x32xf32> to vector<8x32xf32>
    %cst_70 = arith.constant dense<0.000000e+00> : vector<8x32xf32>
    %152 = tpu.matmul %150, %151, %cst_70 {dimension_numbers = #tpu.dot_dimension_numbers<[1], [0], [0], [1], [0, 0, 1, 1], [], []>} : vector<8x8xf32>, vector<8x32xf32>, vector<8x32xf32> -> vector<8x32xf32>
    %153 = arith.addf %135, %152 : vector<8x32xf32>
    %154 = vector.extract_strided_slice %98 {offsets = [0, 24], sizes = [8, 8], strides = [1, 1]} : vector<8x96xf32> to vector<8x8xf32>
    %155 = vector.extract_strided_slice %98 {offsets = [0, 56], sizes = [8, 8], strides = [1, 1]} : vector<8x96xf32> to vector<8x8xf32>
    %156 = vector.extract_strided_slice %98 {offsets = [0, 88], sizes = [8, 8], strides = [1, 1]} : vector<8x96xf32> to vector<8x8xf32>
    %cst_71 = arith.constant dense<0.000000e+00> : vector<8x8xf32>
    %157 = tpu.matmul %154, %155, %cst_71 {dimension_numbers = #tpu.dot_dimension_numbers<[1], [1], [0], [0], [0, 0, 1, 0], [], []>} : vector<8x8xf32>, vector<8x8xf32>, vector<8x8xf32> -> vector<8x8xf32>
    %cst_72 = arith.constant dense<0xFF800000> : vector<8xf32>
    %158 = vector.multi_reduction <maximumf>, %157, %cst_72 [1] : vector<8x8xf32> to vector<8xf32>
    %159 = vector.shape_cast %158 : vector<8xf32> to vector<8x1xf32>
    %160 = vector.broadcast %159 : vector<8x1xf32> to vector<8x8xf32>
    %161 = arith.subf %157, %160 : vector<8x8xf32>
    %162 = math.exp %161 : vector<8x8xf32>
    %cst_73 = arith.constant dense<0.000000e+00> : vector<8xf32>
    %163 = vector.multi_reduction <add>, %162, %cst_73 [1] : vector<8x8xf32> to vector<8xf32>
    %164 = vector.shape_cast %163 : vector<8xf32> to vector<8x1xf32>
    %165 = tpu.reciprocal %164 {approx = true} : vector<8x1xf32> -> vector<8x1xf32>
    %166 = vector.broadcast %165 : vector<8x1xf32> to vector<8x8xf32>
    %167 = arith.mulf %162, %166 : vector<8x8xf32>
    %cst_74 = arith.constant dense<0.000000e+00> : vector<8x8xf32>
    %168 = tpu.matmul %167, %156, %cst_74 {dimension_numbers = #tpu.dot_dimension_numbers<[1], [0], [0], [1], [0, 0, 1, 1], [], []>} : vector<8x8xf32>, vector<8x8xf32>, vector<8x8xf32> -> vector<8x8xf32>
    %169 = vector.extract_strided_slice %93 {offsets = [24, 0], sizes = [8, 32], strides = [1, 1]} : vector<32x32xf32> to vector<8x32xf32>
    %cst_75 = arith.constant dense<0.000000e+00> : vector<8x32xf32>
    %170 = tpu.matmul %168, %169, %cst_75 {dimension_numbers = #tpu.dot_dimension_numbers<[1], [0], [0], [1], [0, 0, 1, 1], [], []>} : vector<8x8xf32>, vector<8x32xf32>, vector<8x32xf32> -> vector<8x32xf32>
    %171 = arith.addf %153, %170 : vector<8x32xf32>
    %172 = vector.broadcast %95 : vector<1x32xf32> to vector<8x32xf32>
    %173 = arith.addf %171, %172 : vector<8x32xf32>
    %cst_76 = arith.constant dense<0.000000e+00> : vector<8xf32>
    %174 = vector.multi_reduction <add>, %173, %cst_76 [1] : vector<8x32xf32> to vector<8xf32>
    %175 = vector.shape_cast %174 : vector<8xf32> to vector<8x1xf32>
    %cst_77 = arith.constant 3.200000e+01 : f32
    %176 = vector.broadcast %cst_77 : f32 to vector<8x1xf32>
    %177 = arith.divf %175, %176 : vector<8x1xf32>
    %178 = vector.broadcast %177 : vector<8x1xf32> to vector<8x32xf32>
    %179 = arith.subf %173, %178 : vector<8x32xf32>
    %180 = arith.mulf %179, %179 : vector<8x32xf32>
    %cst_78 = arith.constant dense<0.000000e+00> : vector<8xf32>
    %181 = vector.multi_reduction <add>, %180, %cst_78 [1] : vector<8x32xf32> to vector<8xf32>
    %182 = vector.shape_cast %181 : vector<8xf32> to vector<8x1xf32>
    %cst_79 = arith.constant 3.200000e+01 : f32
    %183 = vector.broadcast %cst_79 : f32 to vector<8x1xf32>
    %184 = arith.divf %182, %183 : vector<8x1xf32>
    %cst_80 = arith.constant 9.99999974E-6 : f32
    %185 = vector.broadcast %cst_80 : f32 to vector<8x1xf32>
    %186 = arith.addf %184, %185 : vector<8x1xf32>
    %187 = math.rsqrt %186 : vector<8x1xf32>
    %188 = vector.broadcast %177 : vector<8x1xf32> to vector<8x32xf32>
    %189 = arith.subf %173, %188 : vector<8x32xf32>
    %190 = vector.broadcast %187 : vector<8x1xf32> to vector<8x32xf32>
    %191 = arith.mulf %189, %190 : vector<8x32xf32>
    %c0_81 = arith.constant 0 : index
    %c0_82 = arith.constant 0 : index
    %c0_83 = arith.constant 0 : index
    %192 = vector.load %arg6[%c0_81, %c0_82, %c0_83] : memref<1x1x32xf32, #tpu.memory_space<vmem>>, vector<1x1x32xf32>
    %193 = vector.shape_cast %192 : vector<1x1x32xf32> to vector<1x32xf32>
    %194 = vector.broadcast %193 : vector<1x32xf32> to vector<8x32xf32>
    %195 = arith.mulf %191, %194 : vector<8x32xf32>
    %c0_84 = arith.constant 0 : index
    %c0_85 = arith.constant 0 : index
    %c0_86 = arith.constant 0 : index
    %196 = vector.load %arg7[%c0_84, %c0_85, %c0_86] : memref<1x1x32xf32, #tpu.memory_space<vmem>>, vector<1x1x32xf32>
    %197 = vector.shape_cast %196 : vector<1x1x32xf32> to vector<1x32xf32>
    %198 = vector.broadcast %197 : vector<1x32xf32> to vector<8x32xf32>
    %199 = arith.addf %195, %198 : vector<8x32xf32>
    %c0_87 = arith.constant 0 : index
    %c0_88 = arith.constant 0 : index
    %c0_89 = arith.constant 0 : index
    %200 = vector.load %arg8[%c0_87, %c0_88, %c0_89] : memref<1x8x32xf32, #tpu.memory_space<vmem>>, vector<1x8x32xf32>
    %201 = vector.shape_cast %200 : vector<1x8x32xf32> to vector<8x32xf32>
    %202 = vector.shape_cast %199 : vector<8x32xf32> to vector<1x8x32xf32>
    tpu.vector_store %arg8[%c0_87, %c0_88, %c0_89], %202 {strides = array<i32>} : memref<1x8x32xf32, #tpu.memory_space<vmem>>, vector<1x8x32xf32>,
    return
  }
  func.func @transform_0(%arg0: i32) -> (i32, i32, i32) {
    %c0_i32 = arith.constant 0 : i32
    %c0_i32_0 = arith.constant 0 : i32
    %c0_i32_1 = arith.constant 0 : i32
    return %arg0, %c0_i32, %c0_i32_0 : i32, i32, i32
  }
  func.func @transform_1(%arg0: i32) -> (i32, i32, i32, i32) {
    %c0_i32 = arith.constant 0 : i32
    %c0_i32_0 = arith.constant 0 : i32
    %c0_i32_1 = arith.constant 0 : i32
    %c0_i32_2 = arith.constant 0 : i32
    return %arg0, %c0_i32, %c0_i32_0, %c0_i32_1 : i32, i32, i32, i32
  }
  func.func @transform_2(%arg0: i32) -> (i32, i32, i32, i32) {
    %c0_i32 = arith.constant 0 : i32
    %c0_i32_0 = arith.constant 0 : i32
    %c0_i32_1 = arith.constant 0 : i32
    %c0_i32_2 = arith.constant 0 : i32
    return %arg0, %c0_i32, %c0_i32_0, %c0_i32_1 : i32, i32, i32, i32
  }
  func.func @transform_3(%arg0: i32) -> (i32, i32, i32, i32) {
    %c0_i32 = arith.constant 0 : i32
    %c0_i32_0 = arith.constant 0 : i32
    %c0_i32_1 = arith.constant 0 : i32
    %c0_i32_2 = arith.constant 0 : i32
    return %arg0, %c0_i32, %c0_i32_0, %c0_i32_1 : i32, i32, i32, i32
  }
  func.func @transform_4(%arg0: i32) -> (i32, i32, i32, i32) {
    %c0_i32 = arith.constant 0 : i32
    %c0_i32_0 = arith.constant 0 : i32
    %c0_i32_1 = arith.constant 0 : i32
    %c0_i32_2 = arith.constant 0 : i32
    return %arg0, %c0_i32, %c0_i32_0, %c0_i32_1 : i32, i32, i32, i32
  }
  func.func @transform_5(%arg0: i32) -> (i32, i32, i32) {
    %c0_i32 = arith.constant 0 : i32
    %c0_i32_0 = arith.constant 0 : i32
    %c0_i32_1 = arith.constant 0 : i32
    return %arg0, %c0_i32, %c0_i32_0 : i32, i32, i32
  }
  func.func @transform_6(%arg0: i32) -> (i32, i32, i32) {
    %c0_i32 = arith.constant 0 : i32
    %c0_i32_0 = arith.constant 0 : i32
    %c0_i32_1 = arith.constant 0 : i32
    return %arg0, %c0_i32, %c0_i32_0 : i32, i32, i32
  }
  func.func @transform_7(%arg0: i32) -> (i32, i32, i32) {
    %c0_i32 = arith.constant 0 : i32
    %c0_i32_0 = arith.constant 0 : i32
    %c0_i32_1 = arith.constant 0 : i32
    return %arg0, %c0_i32, %c0_i32_0 : i32, i32, i32
  }
}

</mosaic_0001>

<llo_original>
// kernel: random_walk_forward.1
$region0: #{random_walk_forward.1}
  #allocation0 [shape = 'u32[]', space=smem, size = 0x4, offset = 0x4, fixed_abs, tag = 'smem constant byte address 0x4 - core index']
  #allocation1 [shape = 'u32[144,128]{1,0:T(1,128)}', space=vmem, size = 0x12000, scoped, tag = 'internal scratch']
  %s0 = inlined_call_operand.vmem [shape: f32[2,8,32], index: 0, kind: input, shape index: {}]
  %s1 = inlined_call_operand.vmem [shape: f32[2,2,32,96], index: 1, kind: input, shape index: {}]
  %s2 = inlined_call_operand.vmem [shape: f32[2,2,1,96], index: 2, kind: input, shape index: {}]
  %s3 = inlined_call_operand.hbm [shape: f32[2,2,32,32], index: 3, kind: input, shape index: {}]
  %s4 = inlined_call_operand.vmem [shape: f32[2,2,1,32], index: 4, kind: input, shape index: {}]
  %s5 = inlined_call_operand.vmem [shape: f32[2,1,32], index: 5, kind: input, shape index: {}]
  %s6 = inlined_call_operand.vmem [shape: f32[2,1,32], index: 6, kind: input, shape index: {}]
  %s7 = inlined_call_operand.vmem [shape: f32[2,8,32], index: 7, kind: output, shape index: {}]
  %s8 = sld [smem:[#allocation0]]
  $region65: #{random_walk_forward.1} parent=0
    _
  %s10 = ssub.s32 1, %s8
  %s11 = scalar_select 0, %s10, %s8
  $region1: #{random_walk_forward.1} parent=0
    #allocation2 [shape = 'u8[65536]{0}', space=vmem, size = 0x10000, scoped, tag = 'input window, operand 3']
    #allocation3 [shape = 's32[2]{0}', space=sflag, size = 0x8, scoped, tag = 'scoped memory for random_walk_forward.1']
    %12 = vsyncpa [#allocation3], 0
    %s13 = scalar_lea.sflag [#allocation3], 1
    %14 = vsyncpa %s13, 0
    loop: start=0, step=1, limit=4
    $region2: #{random_walk_forward.1} parent=1 // loop_pre_header
      _
    $region3: #{random_walk_forward.1} parent=1 // loop_header
      %s16 = sphi 0, %s20
      %p17 = scmp.ge.s32.totalorder %s16, 4
      %s26 = sphi 0, %s28
      %s29 = sphi 0, %s26
      %s30 = sphi 0, %s29
      %s46 = sphi 0, %s30
      %s52 = sphi 0, %s54
      %s55 = sphi 0, %s52
      %s56 = sphi 0, %s55
      %s72 = sphi 0, %s56
      %s78 = sphi 0, %s80
      %s81 = sphi 0, %s78
      %s82 = sphi 0, %s81
      %s98 = sphi 0, %s82
      %s104 = sphi 0, %s106
      %s107 = sphi 0, %s104
      %s108 = sphi 0, %s107
      %s124 = sphi 0, %s108
      %s130 = sphi 0, %s132
      %s133 = sphi 0, %s130
      %s134 = sphi 0, %s133
      %s150 = sphi 0, %s134
      %s156 = sphi 0, %s158
      %s159 = sphi 0, %s156
      %s160 = sphi 0, %s159
      %s176 = sphi 0, %s160
      %s182 = sphi 0, %s184
      %s185 = sphi 0, %s182
      %s186 = sphi 0, %s185
      %s202 = sphi 0, %s186
      %s208 = sphi 0, %s210
      %s211 = sphi 0, %s208
      %s212 = sphi 0, %s211
      %s228 = sphi 0, %s212
    $region4: #{random_walk_forward.1} parent=1 // loop_header_branch
      %19 = sbr.rel (%p17) target = $region8
    $region5: #{random_walk_forward.1} parent=1 // loop_body
      %s21 = ssub.s32 %s16, 1
      %s22 = ssub.s32 %s16, 2
      %s23 = sadd.s32 %s16, 1
      %s24 = ssub.s32 %s16, %s23
      %p25 = scmp.eq.s32.totalorder %s24, 0
      %s27 = sadd.s32 %s26, 1
      %s28 = scalar_select %p25, %s26, %s27
      %p31 = pneg %p25
      %p32 = scmp.eq.s32.totalorder %s16, 1
      %p33 = por %p31, %p32
      %p34 = scmp.ne.s32.totalorder %s26, %s29
      %p35 = scmp.eq.s32.totalorder %s16, 0
      %p36 = por %p34, %p35
      %p37 = scmp.ne.s32.totalorder %s26, %s29
      %p38 = scmp.eq.s32.totalorder %s21, 1
      %p39 = por %p37, %p38
      %p40 = scmp.ne.s32.totalorder %s29, %s30
      %p41 = scmp.eq.s32.totalorder %s21, 0
      %p42 = por %p40, %p41
      %p43 = scmp.ne.s32.totalorder %s29, %s30
      %p44 = scmp.eq.s32.totalorder %s22, 1
      %p45 = por %p43, %p44
      %p47 = scmp.ne.s32.totalorder %s30, %s46
      %p48 = scmp.eq.s32.totalorder %s22, 0
      %p49 = por %p47, %p48
      %s50 = ssub.s32 %s16, %s23
      %p51 = scmp.eq.s32.totalorder %s50, 0
      %s53 = sadd.s32 %s52, 1
      %s54 = scalar_select %p51, %s52, %s53
      %p57 = pneg %p51
      %p58 = scmp.eq.s32.totalorder %s16, 1
      %p59 = por %p57, %p58
      %p60 = scmp.ne.s32.totalorder %s52, %s55
      %p61 = scmp.eq.s32.totalorder %s16, 0
      %p62 = por %p60, %p61
      %p63 = scmp.ne.s32.totalorder %s52, %s55
      %p64 = scmp.eq.s32.totalorder %s21, 1
      %p65 = por %p63, %p64
      %p66 = scmp.ne.s32.totalorder %s55, %s56
      %p67 = scmp.eq.s32.totalorder %s21, 0
      %p68 = por %p66, %p67
      %p69 = scmp.ne.s32.totalorder %s55, %s56
      %p70 = scmp.eq.s32.totalorder %s22, 1
      %p71 = por %p69, %p70
      %p73 = scmp.ne.s32.totalorder %s56, %s72
      %p74 = scmp.eq.s32.totalorder %s22, 0
      %p75 = por %p73, %p74
      %s76 = ssub.s32 %s16, %s23
      %p77 = scmp.eq.s32.totalorder %s76, 0
      %s79 = sadd.s32 %s78, 1
      %s80 = scalar_select %p77, %s78, %s79
      %p83 = pneg %p77
      %p84 = scmp.eq.s32.totalorder %s16, 1
      %p85 = por %p83, %p84
      %p86 = scmp.ne.s32.totalorder %s78, %s81
      %p87 = scmp.eq.s32.totalorder %s16, 0
      %p88 = por %p86, %p87
      %p89 = scmp.ne.s32.totalorder %s78, %s81
      %p90 = scmp.eq.s32.totalorder %s21, 1
      %p91 = por %p89, %p90
      %p92 = scmp.ne.s32.totalorder %s81, %s82
      %p93 = scmp.eq.s32.totalorder %s21, 0
      %p94 = por %p92, %p93
      %p95 = scmp.ne.s32.totalorder %s81, %s82
      %p96 = scmp.eq.s32.totalorder %s22, 1
      %p97 = por %p95, %p96
      %p99 = scmp.ne.s32.totalorder %s82, %s98
      %p100 = scmp.eq.s32.totalorder %s22, 0
      %p101 = por %p99, %p100
      %s102 = ssub.s32 %s16, %s23
      %p103 = scmp.eq.s32.totalorder %s102, 0
      %s105 = sadd.s32 %s104, 1
      %s106 = scalar_select %p103, %s104, %s105
      %p109 = pneg %p103
      %p110 = scmp.eq.s32.totalorder %s16, 1
      %p111 = por %p109, %p110
      %p112 = scmp.ne.s32.totalorder %s104, %s107
      %p113 = scmp.eq.s32.totalorder %s16, 0
      %p114 = por %p112, %p113
      %p115 = scmp.ne.s32.totalorder %s104, %s107
      %p116 = scmp.eq.s32.totalorder %s21, 1
      %p117 = por %p115, %p116
      %p118 = scmp.ne.s32.totalorder %s107, %s108
      %p119 = scmp.eq.s32.totalorder %s21, 0
      %p120 = por %p118, %p119
      %p121 = scmp.ne.s32.totalorder %s107, %s108
      %p122 = scmp.eq.s32.totalorder %s22, 1
      %p123 = por %p121, %p122
      %p125 = scmp.ne.s32.totalorder %s108, %s124
      %p126 = scmp.eq.s32.totalorder %s22, 0
      %p127 = por %p125, %p126
      %s128 = ssub.s32 %s16, %s23
      %p129 = scmp.eq.s32.totalorder %s128, 0
      %s131 = sadd.s32 %s130, 1
      %s132 = scalar_select %p129, %s130, %s131
      %p135 = pneg %p129
      %p136 = scmp.eq.s32.totalorder %s16, 1
      %p137 = por %p135, %p136
      %p138 = scmp.ne.s32.totalorder %s130, %s133
      %p139 = scmp.eq.s32.totalorder %s16, 0
      %p140 = por %p138, %p139
      %p141 = scmp.ne.s32.totalorder %s130, %s133
      %p142 = scmp.eq.s32.totalorder %s21, 1
      %p143 = por %p141, %p142
      %p144 = scmp.ne.s32.totalorder %s133, %s134
      %p145 = scmp.eq.s32.totalorder %s21, 0
      %p146 = por %p144, %p145
      %p147 = scmp.ne.s32.totalorder %s133, %s134
      %p148 = scmp.eq.s32.totalorder %s22, 1
      %p149 = por %p147, %p148
      %p151 = scmp.ne.s32.totalorder %s134, %s150
      %p152 = scmp.eq.s32.totalorder %s22, 0
      %p153 = por %p151, %p152
      %s154 = ssub.s32 %s16, %s23
      %p155 = scmp.eq.s32.totalorder %s154, 0
      %s157 = sadd.s32 %s156, 1
      %s158 = scalar_select %p155, %s156, %s157
      %p161 = pneg %p155
      %p162 = scmp.eq.s32.totalorder %s16, 1
      %p163 = por %p161, %p162
      %p164 = scmp.ne.s32.totalorder %s156, %s159
      %p165 = scmp.eq.s32.totalorder %s16, 0
      %p166 = por %p164, %p165
      %p167 = scmp.ne.s32.totalorder %s156, %s159
      %p168 = scmp.eq.s32.totalorder %s21, 1
      %p169 = por %p167, %p168
      %p170 = scmp.ne.s32.totalorder %s159, %s160
      %p171 = scmp.eq.s32.totalorder %s21, 0
      %p172 = por %p170, %p171
      %p173 = scmp.ne.s32.totalorder %s159, %s160
      %p174 = scmp.eq.s32.totalorder %s22, 1
      %p175 = por %p173, %p174
      %p177 = scmp.ne.s32.totalorder %s160, %s176
      %p178 = scmp.eq.s32.totalorder %s22, 0
      %p179 = por %p177, %p178
      %s180 = ssub.s32 %s16, %s23
      %p181 = scmp.eq.s32.totalorder %s180, 0
      %s183 = sadd.s32 %s182, 1
      %s184 = scalar_select %p181, %s182, %s183
      %p187 = pneg %p181
      %p188 = scmp.eq.s32.totalorder %s16, 1
      %p189 = por %p187, %p188
      %p190 = scmp.ne.s32.totalorder %s182, %s185
      %p191 = scmp.eq.s32.totalorder %s16, 0
      %p192 = por %p190, %p191
      %p193 = scmp.ne.s32.totalorder %s182, %s185
      %p194 = scmp.eq.s32.totalorder %s21, 1
      %p195 = por %p193, %p194
      %p196 = scmp.ne.s32.totalorder %s185, %s186
      %p197 = scmp.eq.s32.totalorder %s21, 0
      %p198 = por %p196, %p197
      %p199 = scmp.ne.s32.totalorder %s185, %s186
      %p200 = scmp.eq.s32.totalorder %s22, 1
      %p201 = por %p199, %p200
      %p203 = scmp.ne.s32.totalorder %s186, %s202
      %p204 = scmp.eq.s32.totalorder %s22, 0
      %p205 = por %p203, %p204
      %s206 = ssub.s32 %s16, %s23
      %p207 = scmp.eq.s32.totalorder %s206, 0
      %s209 = sadd.s32 %s208, 1
      %s210 = scalar_select %p207, %s208, %s209
      %p213 = pneg %p207
      %p214 = scmp.eq.s32.totalorder %s16, 1
      %p215 = por %p213, %p214
      %p216 = scmp.ne.s32.totalorder %s208, %s211
      %p217 = scmp.eq.s32.totalorder %s16, 0
      %p218 = por %p216, %p217
      %p219 = scmp.ne.s32.totalorder %s208, %s211
      %p220 = scmp.eq.s32.totalorder %s21, 1
      %p221 = por %p219, %p220
      %p222 = scmp.ne.s32.totalorder %s211, %s212
      %p223 = scmp.eq.s32.totalorder %s21, 0
      %p224 = por %p222, %p223
      %p225 = scmp.ne.s32.totalorder %s211, %s212
      %p226 = scmp.eq.s32.totalorder %s22, 1
      %p227 = por %p225, %p226
      %p229 = scmp.ne.s32.totalorder %s212, %s228
      %p230 = scmp.eq.s32.totalorder %s22, 0
      %p231 = por %p229, %p230
      %p232 = scmp.le.s32.totalorder 1, %s16
      %p233 = scmp.lt.s32.totalorder %s16, 3
      %p234 = pnand %p232, %p233
      %p235 = pneg %p234
      // Predicated region
      $region9: #{random_walk_forward.1} parent=5 // pred_check
        _
      $region10: #{random_walk_forward.1} parent=5 // pred_check_branch
        %237 = sbr.rel (%p234) target = $region12
      $region11: #{random_walk_forward.1} parent=5 // pred_region
        %s238 = ssub.s32 %s16, 1
      $region12: #{random_walk_forward.1} parent=5 // pred_fallthru
        _
      %p239 = scmp.lt.s32.totalorder %s16, 2
      // Predicated region
      $region13: #{random_walk_forward.1} parent=5 // pred_check
        %p240 = pneg %p239
      $region14: #{random_walk_forward.1} parent=5 // pred_check_branch
        %242 = sbr.rel (%p240) target = $region16
      $region15: #{random_walk_forward.1} parent=5 // pred_region
        // Predicated region
        $region17: #{random_walk_forward.1} parent=15 // pred_check
          %p243 = pneg %p36
        $region18: #{random_walk_forward.1} parent=15 // pred_check_branch
          %245 = sbr.rel (%p243) target = $region20
        $region19: #{random_walk_forward.1} parent=15 // pred_region
          %p246 = scmp.lt.s32.totalorder %s16, 1
          %s247 = scalar_select %p246, %s16, 1
          %s248 = smul.addr %s247, 8
          %s249 = scalar_lea.vmem %s0, %s248
        $region20: #{random_walk_forward.1} parent=15 // pred_fallthru
          _
        // Predicated region
        $region21: #{random_walk_forward.1} parent=15 // pred_check
          %p250 = pneg %p62
        $region22: #{random_walk_forward.1} parent=15 // pred_check_branch
          %252 = sbr.rel (%p250) target = $region24
        $region23: #{random_walk_forward.1} parent=15 // pred_region
          %p253 = scmp.lt.s32.totalorder %s16, 1
          %s254 = scalar_select %p253, %s16, 1
          %s255 = smul.addr %s254, 8
          %s256 = smul.addr %s255, 8
          %s257 = scalar_lea.vmem %s1, %s256
        $region24: #{random_walk_forward.1} parent=15 // pred_fallthru
          _
        // Predicated region
        $region25: #{random_walk_forward.1} parent=15 // pred_check
          %p258 = pneg %p88
        $region26: #{random_walk_forward.1} parent=15 // pred_check_branch
          %260 = sbr.rel (%p258) target = $region28
        $region27: #{random_walk_forward.1} parent=15 // pred_region
          %p261 = scmp.lt.s32.totalorder %s16, 1
          %s262 = scalar_select %p261, %s16, 1
          %s263 = smul.addr %s262, 2
          %s264 = scalar_lea.vmem %s2, %s263
        $region28: #{random_walk_forward.1} parent=15 // pred_fallthru
          _
        // Predicated region
        $region29: #{random_walk_forward.1} parent=15 // pred_check
          %p265 = pneg %p114
        $region30: #{random_walk_forward.1} parent=15 // pred_check_branch
          %267 = sbr.rel (%p265) target = $region32
        $region31: #{random_walk_forward.1} parent=15 // pred_region
          %s268 = sand.u32 %s104, 1
          %s269 = scalar_lea.sflag [#allocation3], %s268
          %s270 = sand.u32 %s104, 1
          %s271 = smul.addr %s270, 64
          %s272 = scalar_lea.vmem [#allocation2], %s271
          %s274 = ssub.s32 1024, 1024
          %275 = vsyncadd %s269, %s274
          %s276 = smul.addr %s16, 8
          %s277 = smul.addr %s276, 128
          %s278 = scalar_lea.hbm %s3, %s277
          %s279 = sshll.u32 %s272, 4
          %s280 = int_to_ptr.vmem [resolvable:$true] %s279
          %285 = dma.hbm_to_vmem [thread:$0]  %s278, 1024, %s280, %s269, 128, 128, 8
        $region32: #{random_walk_forward.1} parent=15 // pred_fallthru
          _
        // Predicated region
        $region33: #{random_walk_forward.1} parent=15 // pred_check
          %p286 = pneg %p140
        $region34: #{random_walk_forward.1} parent=15 // pred_check_branch
          %288 = sbr.rel (%p286) target = $region36
        $region35: #{random_walk_forward.1} parent=15 // pred_region
          %p289 = scmp.lt.s32.totalorder %s16, 1
          %s290 = scalar_select %p289, %s16, 1
          %s291 = smul.addr %s290, 2
          %s292 = scalar_lea.vmem %s4, %s291
        $region36: #{random_walk_forward.1} parent=15 // pred_fallthru
          _
        // Predicated region
        $region37: #{random_walk_forward.1} parent=15 // pred_check
          %p293 = pneg %p166
        $region38: #{random_walk_forward.1} parent=15 // pred_check_branch
          %295 = sbr.rel (%p293) target = $region40
        $region39: #{random_walk_forward.1} parent=15 // pred_region
          %p296 = scmp.lt.s32.totalorder %s16, 1
          %s297 = scalar_select %p296, %s16, 1
          %s298 = scalar_lea.vmem %s5, %s297
        $region40: #{random_walk_forward.1} parent=15 // pred_fallthru
          _
        // Predicated region
        $region41: #{random_walk_forward.1} parent=15 // pred_check
          %p299 = pneg %p192
        $region42: #{random_walk_forward.1} parent=15 // pred_check_branch
          %301 = sbr.rel (%p299) target = $region44
        $region43: #{random_walk_forward.1} parent=15 // pred_region
          %p302 = scmp.lt.s32.totalorder %s16, 1
          %s303 = scalar_select %p302, %s16, 1
          %s304 = scalar_lea.vmem %s6, %s303
        $region44: #{random_walk_forward.1} parent=15 // pred_fallthru
          _
      $region16: #{random_walk_forward.1} parent=5 // pred_fallthru
        _
      %p305 = scmp.le.s32.totalorder 1, %s16
      %p306 = scmp.lt.s32.totalorder %s16, 3
      %p307 = pnand %p305, %p306
      %p308 = pneg %p307
      // Predicated region
      $region45: #{random_walk_forward.1} parent=5 // pred_check
        _
      $region46: #{random_walk_forward.1} parent=5 // pred_check_branch
        %310 = sbr.rel (%p307) target = $region48
      $region47: #{random_walk_forward.1} parent=5 // pred_region
        %s311 = ssub.s32 %s16, 1
        %s312 = sand.u32 %s107, 1
        %s313 = scalar_lea.sflag [#allocation3], %s312
        %s314 = sand.u32 %s107, 1
        %s315 = smul.addr %s314, 64
        %s316 = scalar_lea.vmem [#allocation2], %s315
        // Predicated region
        $region49: #{random_walk_forward.1} parent=47 // pred_check
          %p317 = pneg %p120
        $region50: #{random_walk_forward.1} parent=47 // pred_check_branch
          %319 = sbr.rel (%p317) target = $region52
        $region51: #{random_walk_forward.1} parent=47 // pred_region
          %320 = dma.done %s313, 1024
        $region52: #{random_walk_forward.1} parent=47 // pred_fallthru
          _
        %p321 = scmp.lt.s32.totalorder %s21, 1
        %s322 = scalar_select %p321, %s21, 1
        %s323 = smul.addr %s322, 8
        %s324 = scalar_lea.vmem %s0, %s323
        %p325 = pneg %p42
        %p326 = pneg %p39
        %p327 = scmp.lt.s32.totalorder %s21, 1
        %s328 = scalar_select %p327, %s21, 1
        %s329 = smul.addr %s328, 8
        %s330 = smul.addr %s329, 8
        %s331 = scalar_lea.vmem %s1, %s330
        %p332 = pneg %p68
        %p333 = pneg %p65
        %p334 = scmp.lt.s32.totalorder %s21, 1
        %s335 = scalar_select %p334, %s21, 1
        %s336 = smul.addr %s335, 2
        %s337 = scalar_lea.vmem %s2, %s336
        %p338 = pneg %p94
        %p339 = pneg %p91
        %s340 = sand.u32 %s107, 1
        %s341 = scalar_lea.sflag [#allocation3], %s340
        %s342 = sand.u32 %s107, 1
        %s343 = smul.addr %s342, 64
        %s344 = scalar_lea.vmem [#allocation2], %s343
        %p345 = pneg %p120
        %p346 = pneg %p117
        %p347 = scmp.lt.s32.totalorder %s21, 1
        %s348 = scalar_select %p347, %s21, 1
        %s349 = smul.addr %s348, 2
        %s350 = scalar_lea.vmem %s4, %s349
        %p351 = pneg %p146
        %p352 = pneg %p143
        %p353 = scmp.lt.s32.totalorder %s21, 1
        %s354 = scalar_select %p353, %s21, 1
        %s355 = scalar_lea.vmem %s5, %s354
        %p356 = pneg %p172
        %p357 = pneg %p169
        %p358 = scmp.lt.s32.totalorder %s21, 1
        %s359 = scalar_select %p358, %s21, 1
        %s360 = scalar_lea.vmem %s6, %s359
        %p361 = pneg %p198
        %p362 = pneg %p195
        %p363 = pneg %p224
        %p364 = pneg %p221
        %p365 = scmp.lt.s32.totalorder %s21, 1
        %s366 = scalar_select %p365, %s21, 1
        %s367 = smul.addr %s366, 8
        %s368 = scalar_lea.vmem %s7, %s367
        %p369 = scmp.lt.s32.totalorder %s21, 1
        %s370 = scalar_select %p369, %s21, 1
        %s371 = smul.addr %s370, 8
        %s372 = scalar_lea.vmem %s0, %s371
        %p373 = scmp.lt.s32.totalorder %s21, 1
        %s374 = scalar_select %p373, %s21, 1
        %s375 = smul.addr %s374, 8
        %s376 = smul.addr %s375, 8
        %s377 = scalar_lea.vmem %s1, %s376
        %p378 = scmp.lt.s32.totalorder %s21, 1
        %s379 = scalar_select %p378, %s21, 1
        %s380 = smul.addr %s379, 2
        %s381 = scalar_lea.vmem %s2, %s380
        %p382 = scmp.lt.s32.totalorder %s21, 1
        %s383 = scalar_select %p382, %s21, 1
        %s384 = smul.addr %s383, 2
        %s385 = scalar_lea.vmem %s4, %s384
        %p386 = scmp.lt.s32.totalorder %s21, 1
        %s387 = scalar_select %p386, %s21, 1
        %s388 = scalar_lea.vmem %s5, %s387
        %p389 = scmp.lt.s32.totalorder %s21, 1
        %s390 = scalar_select %p389, %s21, 1
        %s391 = scalar_lea.vmem %s6, %s390
        %p392 = scmp.lt.s32.totalorder %s21, 1
        %s393 = scalar_select %p392, %s21, 1
        %s394 = smul.addr %s393, 8
        %s395 = scalar_lea.vmem %s7, %s394
        %v396 = vld [vmem:[%s372] sm:$0xff]
        %v397 = vld [vmem:[%s377] sm:$0xff]
        %v398 = vld [vmem:[%s377 + $0x8] sm:$0xff]
        %v399 = vld [vmem:[%s377 + $0x10] sm:$0xff]
        %v400 = vld [vmem:[%s377 + $0x18] sm:$0xff]
        %v401 = vld [vmem:[%s381] sm:$0x1]
        %v402 = vld [vmem:[%s316] sm:$0xff]
        %v403 = vld [vmem:[%s316 + $0x8] sm:$0xff]
        %v404 = vld [vmem:[%s316 + $0x10] sm:$0xff]
        %v405 = vld [vmem:[%s316 + $0x18] sm:$0xff]
        %v406 = vld [vmem:[%s385] sm:$0x1]
        %v408 = vlaneseq
        %v409 = vshrl.u32 %v408, 7
        %v410 = vsub.s32 0, %v409
        %v411 = vrot.slane %v401, %v410
        %vm413 = vcmask 261120
        %v415 = vsel %vm413, %v396, 0
        %417 = vmatprep.subr.mxu0 0.0
        %418 = vmatpush1.msra.mxu0 %v397
        %419 = vmatprep.subr.mxu0 0.0
        %420 = vmatpush1.msra.mxu0 %v398
        %421 = vmatprep.subr.mxu0 0.0
        %422 = vmatpush1.msra.mxu0 %v399
        %423 = vmatprep.subr.mxu0 0.0
        %424 = vmatpush1.msra.mxu0 %v400
        %425 = vmatprep.subr.mxu0 0.0
        %426 = vmatpush1.msra.mxu0 0.0
        %427 = vmatprep.subr.mxu0 0.0
        %428 = vmatpush1.msra.mxu0 0.0
        %429 = vmatprep.subr.mxu0 0.0
        %430 = vmatpush1.msra.mxu0 0.0
        %431 = vmatprep.subr.mxu0 0.0
        %432 = vmatpush1.msra.mxu0 0.0
        %433 = vmatprep.subr.mxu0 0.0
        %434 = vmatpush1.msra.mxu0 0.0
        %435 = vmatprep.subr.mxu0 0.0
        %436 = vmatpush1.msra.mxu0 0.0
        %437 = vmatprep.subr.mxu0 0.0
        %438 = vmatpush1.msra.mxu0 0.0
        %439 = vmatprep.subr.mxu0 0.0
        %440 = vmatpush1.msra.mxu0 0.0
        %441 = vmatprep.subr.mxu0 0.0
        %442 = vmatpush1.msra.mxu0 0.0
        %443 = vmatprep.subr.mxu0 0.0
        %444 = vmatpush1.msra.mxu0 0.0
        %445 = vmatprep.subr.mxu0 0.0
        %446 = vmatpush1.msra.mxu0 0.0
        %447 = vmatprep.subr.mxu0 0.0
        %448 = vmatpush1.msra.mxu0 0.0
        %449 = vmatprep.subr.mxu0 0.0
        %450 = vmatpush1.msra.mxu0 0.0
        %451 = vmatprep.subr.mxu0 0.0
        %452 = vmatpush1.msra.mxu0 0.0
        %453 = vmatprep.subr.mxu0 0.0
        %454 = vmatpush1.msra.mxu0 0.0
        %455 = vmatprep.subr.mxu0 0.0
        %456 = vmatpush1.msra.mxu0 0.0
        %457 = vmatprep.subr.mxu0 0.0
        %458 = vmatpush1.msra.mxu0 0.0
        %459 = vmatprep.subr.mxu0 0.0
        %460 = vmatpush1.msra.mxu0 0.0
        %461 = vmatprep.subr.mxu0 0.0
        %462 = vmatpush1.msra.mxu0 0.0
        %463 = vmatprep.subr.mxu0 0.0
        %464 = vmatpush1.msra.mxu0 0.0
        %465 = vmatprep.subr.mxu0 0.0
        %466 = vmatpush1.msra.mxu0 0.0
        %467 = vmatprep.subr.mxu0 0.0
        %468 = vmatpush1.msra.mxu0 0.0
        %469 = vmatprep.subr.mxu0 0.0
        %470 = vmatpush1.msra.mxu0 0.0
        %471 = vmatprep.subr.mxu0 0.0
        %472 = vmatpush1.msra.mxu0 0.0
        %473 = vmatprep.subr.mxu0 0.0
        %474 = vmatpush1.msra.mxu0 0.0
        %475 = vmatprep.subr.mxu0 0.0
        %476 = vmatpush1.msra.mxu0 0.0
        %477 = vmatprep.subr.mxu0 0.0
        %478 = vmatpush1.msra.mxu0 0.0
        %479 = vmatprep.subr.mxu0 0.0
        %480 = vmatpush1.msra.mxu0 0.0
        %481 = vmatprep.mubr.f32.mxu0 0.0
        %482 = vmatmul.mubr.f32.gmra.mrb[0].mxu0 %v415
        %v483 = vpop.f32.mrb[0].mxu0
        %v484 = vadd.f32 %v411, %v483
        %v485 = vpop.f32.mrb[0].mxu0
        %486 = vdwg.mxu0
        %488 = vrot.lane.b32.xlu0 %v484, 96
        %v489 = vpop.permute.xlu0 %488
        %vm490 = vcmask 64512
        %v491 = vsel %vm490, %v484, 0
        %v493 = vsel %vm490, %v489, 0
        %495 = vmatprep.subr.mxu0 0.0
        %496 = vmatpush1.xpose.msra.mxu0 %v493
        %497 = vmatprep.subr.mxu0 0.0
        %498 = vmatpush1.xpose.msra.mxu0 0.0
        %499 = vmatprep.subr.mxu0 0.0
        %500 = vmatpush1.xpose.msra.mxu0 0.0
        %501 = vmatprep.subr.mxu0 0.0
        %502 = vmatpush1.xpose.msra.mxu0 0.0
        %503 = vmatprep.subr.mxu0 0.0
        %504 = vmatpush1.xpose.msra.mxu0 0.0
        %505 = vmatprep.subr.mxu0 0.0
        %506 = vmatpush1.xpose.msra.mxu0 0.0
        %507 = vmatprep.subr.mxu0 0.0
        %508 = vmatpush1.xpose.msra.mxu0 0.0
        %509 = vmatprep.subr.mxu0 0.0
        %510 = vmatpush1.xpose.msra.mxu0 0.0
        %511 = vmatprep.subr.mxu0 0.0
        %512 = vmatpush1.xpose.msra.mxu0 0.0
        %513 = vmatprep.subr.mxu0 0.0
        %514 = vmatpush1.xpose.msra.mxu0 0.0
        %515 = vmatprep.subr.mxu0 0.0
        %516 = vmatpush1.xpose.msra.mxu0 0.0
        %517 = vmatprep.subr.mxu0 0.0
        %518 = vmatpush1.xpose.msra.mxu0 0.0
        %519 = vmatprep.subr.mxu0 0.0
        %520 = vmatpush1.xpose.msra.mxu0 0.0
        %521 = vmatprep.subr.mxu0 0.0
        %522 = vmatpush1.xpose.msra.mxu0 0.0
        %523 = vmatprep.subr.mxu0 0.0
        %524 = vmatpush1.xpose.msra.mxu0 0.0
        %525 = vmatprep.subr.mxu0 0.0
        %526 = vmatpush1.xpose.msra.mxu0 0.0
        %527 = vmatprep.subr.mxu0 0.0
        %528 = vmatpush1.xpose.msra.mxu0 0.0
        %529 = vmatprep.subr.mxu0 0.0
        %530 = vmatpush1.xpose.msra.mxu0 0.0
        %531 = vmatprep.subr.mxu0 0.0
        %532 = vmatpush1.xpose.msra.mxu0 0.0
        %533 = vmatprep.subr.mxu0 0.0
        %534 = vmatpush1.xpose.msra.mxu0 0.0
        %535 = vmatprep.subr.mxu0 0.0
        %536 = vmatpush1.xpose.msra.mxu0 0.0
        %537 = vmatprep.subr.mxu0 0.0
        %538 = vmatpush1.xpose.msra.mxu0 0.0
        %539 = vmatprep.subr.mxu0 0.0
        %540 = vmatpush1.xpose.msra.mxu0 0.0
        %541 = vmatprep.subr.mxu0 0.0
        %542 = vmatpush1.xpose.msra.mxu0 0.0
        %543 = vmatprep.subr.mxu0 0.0
        %544 = vmatpush1.xpose.msra.mxu0 0.0
        %545 = vmatprep.subr.mxu0 0.0
        %546 = vmatpush1.xpose.msra.mxu0 0.0
        %547 = vmatprep.subr.mxu0 0.0
        %548 = vmatpush1.xpose.msra.mxu0 0.0
        %549 = vmatprep.subr.mxu0 0.0
        %550 = vmatpush1.xpose.msra.mxu0 0.0
        %551 = vmatprep.subr.mxu0 0.0
        %552 = vmatpush1.xpose.msra.mxu0 0.0
        %553 = vmatprep.subr.mxu0 0.0
        %554 = vmatpush1.xpose.msra.mxu0 0.0
        %555 = vmatprep.subr.mxu0 0.0
        %556 = vmatpush1.xpose.msra.mxu0 0.0
        %557 = vmatprep.subr.mxu0 0.0
        %558 = vmatpush1.xpose.msra.mxu0 0.0
        %559 = vmatprep.mubr.f32.mxu0 0.0
        %560 = vmatmul.mubr.f32.gmra.mrb[0].mxu0 %v491
        %v561 = vpop.f32.mrb[0].mxu0
        %v562 = vadd.f32 0.0, %v561
        %v563 = vpop.f32.mrb[0].mxu0
        %564 = vdwg.mxu0
        %v565 = vsel %vm490, %v562, -inf
        %566 = vmax.xlane.f32.xlu0 %v565
        %v567 = vpop.xlane.xlu0 %566
        %v568 = vsub.f32 %v562, %v567
        %v569 = vmul.f32 %v568, 1.442695
        %v570 = vpow.pop %v569
        %v571 = vsel %vm490, %v570, 0.0
        %572 = vadd.xlane.f32.xlu0 %v571
        %v573 = vpop.xlane.xlu0 %572
        %v574 = vrcp.pop %v573
        %v575 = vmul.f32 %v570, %v574
        %576 = vrot.lane.b32.xlu0 %v484, 64
        %v577 = vpop.permute.xlu0 %576
        %v580 = vsel %vm490, %v575, 0
        %582 = vmatprep.subr.mxu0 0.0
        %583 = vmatpush1.msra.mxu0 %v577
        %584 = vmatprep.subr.mxu0 0.0
        %585 = vmatpush1.msra.mxu0 0.0
        %586 = vmatprep.subr.mxu0 0.0
        %587 = vmatpush1.msra.mxu0 0.0
        %588 = vmatprep.subr.mxu0 0.0
        %589 = vmatpush1.msra.mxu0 0.0
        %590 = vmatprep.subr.mxu0 0.0
        %591 = vmatpush1.msra.mxu0 0.0
        %592 = vmatprep.subr.mxu0 0.0
        %593 = vmatpush1.msra.mxu0 0.0
        %594 = vmatprep.subr.mxu0 0.0
        %595 = vmatpush1.msra.mxu0 0.0
        %596 = vmatprep.subr.mxu0 0.0
        %597 = vmatpush1.msra.mxu0 0.0
        %598 = vmatprep.subr.mxu0 0.0
        %599 = vmatpush1.msra.mxu0 0.0
        %600 = vmatprep.subr.mxu0 0.0
        %601 = vmatpush1.msra.mxu0 0.0
        %602 = vmatprep.subr.mxu0 0.0
        %603 = vmatpush1.msra.mxu0 0.0
        %604 = vmatprep.subr.mxu0 0.0
        %605 = vmatpush1.msra.mxu0 0.0
        %606 = vmatprep.subr.mxu0 0.0
        %607 = vmatpush1.msra.mxu0 0.0
        %608 = vmatprep.subr.mxu0 0.0
        %609 = vmatpush1.msra.mxu0 0.0
        %610 = vmatprep.subr.mxu0 0.0
        %611 = vmatpush1.msra.mxu0 0.0
        %612 = vmatprep.subr.mxu0 0.0
        %613 = vmatpush1.msra.mxu0 0.0
        %614 = vmatprep.subr.mxu0 0.0
        %615 = vmatpush1.msra.mxu0 0.0
        %616 = vmatprep.subr.mxu0 0.0
        %617 = vmatpush1.msra.mxu0 0.0
        %618 = vmatprep.subr.mxu0 0.0
        %619 = vmatpush1.msra.mxu0 0.0
        %620 = vmatprep.subr.mxu0 0.0
        %621 = vmatpush1.msra.mxu0 0.0
        %622 = vmatprep.subr.mxu0 0.0
        %623 = vmatpush1.msra.mxu0 0.0
        %624 = vmatprep.subr.mxu0 0.0
        %625 = vmatpush1.msra.mxu0 0.0
        %626 = vmatprep.subr.mxu0 0.0
        %627 = vmatpush1.msra.mxu0 0.0
        %628 = vmatprep.subr.mxu0 0.0
        %629 = vmatpush1.msra.mxu0 0.0
        %630 = vmatprep.subr.mxu0 0.0
        %631 = vmatpush1.msra.mxu0 0.0
        %632 = vmatprep.subr.mxu0 0.0
        %633 = vmatpush1.msra.mxu0 0.0
        %634 = vmatprep.subr.mxu0 0.0
        %635 = vmatpush1.msra.mxu0 0.0
        %636 = vmatprep.subr.mxu0 0.0
        %637 = vmatpush1.msra.mxu0 0.0
        %638 = vmatprep.subr.mxu0 0.0
        %639 = vmatpush1.msra.mxu0 0.0
        %640 = vmatprep.subr.mxu0 0.0
        %641 = vmatpush1.msra.mxu0 0.0
        %642 = vmatprep.subr.mxu0 0.0
        %643 = vmatpush1.msra.mxu0 0.0
        %644 = vmatprep.subr.mxu0 0.0
        %645 = vmatpush1.msra.mxu0 0.0
        %646 = vmatprep.mubr.f32.mxu0 0.0
        %647 = vmatmul.mubr.f32.gmra.mrb[0].mxu0 %v580
        %v648 = vpop.f32.mrb[0].mxu0
        %v649 = vadd.f32 0.0, %v648
        %v650 = vpop.f32.mrb[0].mxu0
        %651 = vdwg.mxu0
        %652 = vrot.lane.b32.xlu0 %v484, 120
        %v653 = vpop.permute.xlu0 %652
        %654 = vrot.lane.b32.xlu0 %v484, 88
        %v655 = vpop.permute.xlu0 %654
        %v656 = vsel %vm490, %v653, 0
        %v658 = vsel %vm490, %v655, 0
        %660 = vmatprep.subr.mxu0 0.0
        %661 = vmatpush1.xpose.msra.mxu0 %v658
        %662 = vmatprep.subr.mxu0 0.0
        %663 = vmatpush1.xpose.msra.mxu0 0.0
        %664 = vmatprep.subr.mxu0 0.0
        %665 = vmatpush1.xpose.msra.mxu0 0.0
        %666 = vmatprep.subr.mxu0 0.0
        %667 = vmatpush1.xpose.msra.mxu0 0.0
        %668 = vmatprep.subr.mxu0 0.0
        %669 = vmatpush1.xpose.msra.mxu0 0.0
        %670 = vmatprep.subr.mxu0 0.0
        %671 = vmatpush1.xpose.msra.mxu0 0.0
        %672 = vmatprep.subr.mxu0 0.0
        %673 = vmatpush1.xpose.msra.mxu0 0.0
        %674 = vmatprep.subr.mxu0 0.0
        %675 = vmatpush1.xpose.msra.mxu0 0.0
        %676 = vmatprep.subr.mxu0 0.0
        %677 = vmatpush1.xpose.msra.mxu0 0.0
        %678 = vmatprep.subr.mxu0 0.0
        %679 = vmatpush1.xpose.msra.mxu0 0.0
        %680 = vmatprep.subr.mxu0 0.0
        %681 = vmatpush1.xpose.msra.mxu0 0.0
        %682 = vmatprep.subr.mxu0 0.0
        %683 = vmatpush1.xpose.msra.mxu0 0.0
        %684 = vmatprep.subr.mxu0 0.0
        %685 = vmatpush1.xpose.msra.mxu0 0.0
        %686 = vmatprep.subr.mxu0 0.0
        %687 = vmatpush1.xpose.msra.mxu0 0.0
        %688 = vmatprep.subr.mxu0 0.0
        %689 = vmatpush1.xpose.msra.mxu0 0.0
        %690 = vmatprep.subr.mxu0 0.0
        %691 = vmatpush1.xpose.msra.mxu0 0.0
        %692 = vmatprep.subr.mxu0 0.0
        %693 = vmatpush1.xpose.msra.mxu0 0.0
        %694 = vmatprep.subr.mxu0 0.0
        %695 = vmatpush1.xpose.msra.mxu0 0.0
        %696 = vmatprep.subr.mxu0 0.0
        %697 = vmatpush1.xpose.msra.mxu0 0.0
        %698 = vmatprep.subr.mxu0 0.0
        %699 = vmatpush1.xpose.msra.mxu0 0.0
        %700 = vmatprep.subr.mxu0 0.0
        %701 = vmatpush1.xpose.msra.mxu0 0.0
        %702 = vmatprep.subr.mxu0 0.0
        %703 = vmatpush1.xpose.msra.mxu0 0.0
        %704 = vmatprep.subr.mxu0 0.0
        %705 = vmatpush1.xpose.msra.mxu0 0.0
        %706 = vmatprep.subr.mxu0 0.0
        %707 = vmatpush1.xpose.msra.mxu0 0.0
        %708 = vmatprep.subr.mxu0 0.0
        %709 = vmatpush1.xpose.msra.mxu0 0.0
        %710 = vmatprep.subr.mxu0 0.0
        %711 = vmatpush1.xpose.msra.mxu0 0.0
        %712 = vmatprep.subr.mxu0 0.0
        %713 = vmatpush1.xpose.msra.mxu0 0.0
        %714 = vmatprep.subr.mxu0 0.0
        %715 = vmatpush1.xpose.msra.mxu0 0.0
        %716 = vmatprep.subr.mxu0 0.0
        %717 = vmatpush1.xpose.msra.mxu0 0.0
        %718 = vmatprep.subr.mxu0 0.0
        %719 = vmatpush1.xpose.msra.mxu0 0.0
        %720 = vmatprep.subr.mxu0 0.0
        %721 = vmatpush1.xpose.msra.mxu0 0.0
        %722 = vmatprep.subr.mxu0 0.0
        %723 = vmatpush1.xpose.msra.mxu0 0.0
        %724 = vmatprep.mubr.f32.mxu0 0.0
        %725 = vmatmul.mubr.f32.gmra.mrb[0].mxu0 %v656
        %v726 = vpop.f32.mrb[0].mxu0
        %v727 = vadd.f32 0.0, %v726
        %v728 = vpop.f32.mrb[0].mxu0
        %729 = vdwg.mxu0
        %v730 = vsel %vm490, %v727, -inf
        %731 = vmax.xlane.f32.xlu0 %v730
        %v732 = vpop.xlane.xlu0 %731
        %v733 = vsub.f32 %v727, %v732
        %v734 = vmul.f32 %v733, 1.442695
        %v735 = vpow.pop %v734
        %v736 = vsel %vm490, %v735, 0.0
        %737 = vadd.xlane.f32.xlu0 %v736
        %v738 = vpop.xlane.xlu0 %737
        %v739 = vrcp.pop %v738
        %v740 = vmul.f32 %v735, %v739
        %741 = vrot.lane.b32.xlu0 %v484, 56
        %v742 = vpop.permute.xlu0 %741
        %v745 = vsel %vm490, %v740, 0
        %747 = vmatprep.subr.mxu0 0.0
        %748 = vmatpush1.msra.mxu0 %v742
        %749 = vmatprep.subr.mxu0 0.0
        %750 = vmatpush1.msra.mxu0 0.0
        %751 = vmatprep.subr.mxu0 0.0
        %752 = vmatpush1.msra.mxu0 0.0
        %753 = vmatprep.subr.mxu0 0.0
        %754 = vmatpush1.msra.mxu0 0.0
        %755 = vmatprep.subr.mxu0 0.0
        %756 = vmatpush1.msra.mxu0 0.0
        %757 = vmatprep.subr.mxu0 0.0
        %758 = vmatpush1.msra.mxu0 0.0
        %759 = vmatprep.subr.mxu0 0.0
        %760 = vmatpush1.msra.mxu0 0.0
        %761 = vmatprep.subr.mxu0 0.0
        %762 = vmatpush1.msra.mxu0 0.0
        %763 = vmatprep.subr.mxu0 0.0
        %764 = vmatpush1.msra.mxu0 0.0
        %765 = vmatprep.subr.mxu0 0.0
        %766 = vmatpush1.msra.mxu0 0.0
        %767 = vmatprep.subr.mxu0 0.0
        %768 = vmatpush1.msra.mxu0 0.0
        %769 = vmatprep.subr.mxu0 0.0
        %770 = vmatpush1.msra.mxu0 0.0
        %771 = vmatprep.subr.mxu0 0.0
        %772 = vmatpush1.msra.mxu0 0.0
        %773 = vmatprep.subr.mxu0 0.0
        %774 = vmatpush1.msra.mxu0 0.0
        %775 = vmatprep.subr.mxu0 0.0
        %776 = vmatpush1.msra.mxu0 0.0
        %777 = vmatprep.subr.mxu0 0.0
        %778 = vmatpush1.msra.mxu0 0.0
        %779 = vmatprep.subr.mxu0 0.0
        %780 = vmatpush1.msra.mxu0 0.0
        %781 = vmatprep.subr.mxu0 0.0
        %782 = vmatpush1.msra.mxu0 0.0
        %783 = vmatprep.subr.mxu0 0.0
        %784 = vmatpush1.msra.mxu0 0.0
        %785 = vmatprep.subr.mxu0 0.0
        %786 = vmatpush1.msra.mxu0 0.0
        %787 = vmatprep.subr.mxu0 0.0
        %788 = vmatpush1.msra.mxu0 0.0
        %789 = vmatprep.subr.mxu0 0.0
        %790 = vmatpush1.msra.mxu0 0.0
        %791 = vmatprep.subr.mxu0 0.0
        %792 = vmatpush1.msra.mxu0 0.0
        %793 = vmatprep.subr.mxu0 0.0
        %794 = vmatpush1.msra.mxu0 0.0
        %795 = vmatprep.subr.mxu0 0.0
        %796 = vmatpush1.msra.mxu0 0.0
        %797 = vmatprep.subr.mxu0 0.0
        %798 = vmatpush1.msra.mxu0 0.0
        %799 = vmatprep.subr.mxu0 0.0
        %800 = vmatpush1.msra.mxu0 0.0
        %801 = vmatprep.subr.mxu0 0.0
        %802 = vmatpush1.msra.mxu0 0.0
        %803 = vmatprep.subr.mxu0 0.0
        %804 = vmatpush1.msra.mxu0 0.0
        %805 = vmatprep.subr.mxu0 0.0
        %806 = vmatpush1.msra.mxu0 0.0
        %807 = vmatprep.subr.mxu0 0.0
        %808 = vmatpush1.msra.mxu0 0.0
        %809 = vmatprep.subr.mxu0 0.0
        %810 = vmatpush1.msra.mxu0 0.0
        %811 = vmatprep.mubr.f32.mxu0 0.0
        %812 = vmatmul.mubr.f32.gmra.mrb[0].mxu0 %v745
        %v813 = vpop.f32.mrb[0].mxu0
        %v814 = vadd.f32 0.0, %v813
        %v815 = vpop.f32.mrb[0].mxu0
        %816 = vdwg.mxu0
        %v818 = vsel %vm490, %v814, 0
        %820 = vmatprep.subr.mxu0 0.0
        %821 = vmatpush1.msra.mxu0 %v403
        %822 = vmatprep.subr.mxu0 0.0
        %823 = vmatpush1.msra.mxu0 0.0
        %824 = vmatprep.subr.mxu0 0.0
        %825 = vmatpush1.msra.mxu0 0.0
        %826 = vmatprep.subr.mxu0 0.0
        %827 = vmatpush1.msra.mxu0 0.0
        %828 = vmatprep.subr.mxu0 0.0
        %829 = vmatpush1.msra.mxu0 0.0
        %830 = vmatprep.subr.mxu0 0.0
        %831 = vmatpush1.msra.mxu0 0.0
        %832 = vmatprep.subr.mxu0 0.0
        %833 = vmatpush1.msra.mxu0 0.0
        %834 = vmatprep.subr.mxu0 0.0
        %835 = vmatpush1.msra.mxu0 0.0
        %836 = vmatprep.subr.mxu0 0.0
        %837 = vmatpush1.msra.mxu0 0.0
        %838 = vmatprep.subr.mxu0 0.0
        %839 = vmatpush1.msra.mxu0 0.0
        %840 = vmatprep.subr.mxu0 0.0
        %841 = vmatpush1.msra.mxu0 0.0
        %842 = vmatprep.subr.mxu0 0.0
        %843 = vmatpush1.msra.mxu0 0.0
        %844 = vmatprep.subr.mxu0 0.0
        %845 = vmatpush1.msra.mxu0 0.0
        %846 = vmatprep.subr.mxu0 0.0
        %847 = vmatpush1.msra.mxu0 0.0
        %848 = vmatprep.subr.mxu0 0.0
        %849 = vmatpush1.msra.mxu0 0.0
        %850 = vmatprep.subr.mxu0 0.0
        %851 = vmatpush1.msra.mxu0 0.0
        %852 = vmatprep.subr.mxu0 0.0
        %853 = vmatpush1.msra.mxu0 0.0
        %854 = vmatprep.subr.mxu0 0.0
        %855 = vmatpush1.msra.mxu0 0.0
        %856 = vmatprep.subr.mxu0 0.0
        %857 = vmatpush1.msra.mxu0 0.0
        %858 = vmatprep.subr.mxu0 0.0
        %859 = vmatpush1.msra.mxu0 0.0
        %860 = vmatprep.subr.mxu0 0.0
        %861 = vmatpush1.msra.mxu0 0.0
        %862 = vmatprep.subr.mxu0 0.0
        %863 = vmatpush1.msra.mxu0 0.0
        %864 = vmatprep.subr.mxu0 0.0
        %865 = vmatpush1.msra.mxu0 0.0
        %866 = vmatprep.subr.mxu0 0.0
        %867 = vmatpush1.msra.mxu0 0.0
        %868 = vmatprep.subr.mxu0 0.0
        %869 = vmatpush1.msra.mxu0 0.0
        %870 = vmatprep.subr.mxu0 0.0
        %871 = vmatpush1.msra.mxu0 0.0
        %872 = vmatprep.subr.mxu0 0.0
        %873 = vmatpush1.msra.mxu0 0.0
        %874 = vmatprep.subr.mxu0 0.0
        %875 = vmatpush1.msra.mxu0 0.0
        %876 = vmatprep.subr.mxu0 0.0
        %877 = vmatpush1.msra.mxu0 0.0
        %878 = vmatprep.subr.mxu0 0.0
        %879 = vmatpush1.msra.mxu0 0.0
        %880 = vmatprep.subr.mxu0 0.0
        %881 = vmatpush1.msra.mxu0 0.0
        %882 = vmatprep.subr.mxu0 0.0
        %883 = vmatpush1.msra.mxu0 0.0
        %884 = vmatprep.mubr.f32.mxu0 0.0
        %885 = vmatmul.mubr.f32.gmra.mrb[0].mxu0 %v818
        %v886 = vpop.f32.mrb[0].mxu0
        %v887 = vadd.f32 0.0, %v886
        %v888 = vpop.f32.mrb[0].mxu0
        %889 = vdwg.mxu0
        %v891 = vsel %vm490, %v649, 0
        %893 = vmatprep.subr.mxu0 0.0
        %894 = vmatpush1.msra.mxu0 %v402
        %895 = vmatprep.subr.mxu0 0.0
        %896 = vmatpush1.msra.mxu0 0.0
        %897 = vmatprep.subr.mxu0 0.0
        %898 = vmatpush1.msra.mxu0 0.0
        %899 = vmatprep.subr.mxu0 0.0
        %900 = vmatpush1.msra.mxu0 0.0
        %901 = vmatprep.subr.mxu0 0.0
        %902 = vmatpush1.msra.mxu0 0.0
        %903 = vmatprep.subr.mxu0 0.0
        %904 = vmatpush1.msra.mxu0 0.0
        %905 = vmatprep.subr.mxu0 0.0
        %906 = vmatpush1.msra.mxu0 0.0
        %907 = vmatprep.subr.mxu0 0.0
        %908 = vmatpush1.msra.mxu0 0.0
        %909 = vmatprep.subr.mxu0 0.0
        %910 = vmatpush1.msra.mxu0 0.0
        %911 = vmatprep.subr.mxu0 0.0
        %912 = vmatpush1.msra.mxu0 0.0
        %913 = vmatprep.subr.mxu0 0.0
        %914 = vmatpush1.msra.mxu0 0.0
        %915 = vmatprep.subr.mxu0 0.0
        %916 = vmatpush1.msra.mxu0 0.0
        %917 = vmatprep.subr.mxu0 0.0
        %918 = vmatpush1.msra.mxu0 0.0
        %919 = vmatprep.subr.mxu0 0.0
        %920 = vmatpush1.msra.mxu0 0.0
        %921 = vmatprep.subr.mxu0 0.0
        %922 = vmatpush1.msra.mxu0 0.0
        %923 = vmatprep.subr.mxu0 0.0
        %924 = vmatpush1.msra.mxu0 0.0
        %925 = vmatprep.subr.mxu0 0.0
        %926 = vmatpush1.msra.mxu0 0.0
        %927 = vmatprep.subr.mxu0 0.0
        %928 = vmatpush1.msra.mxu0 0.0
        %929 = vmatprep.subr.mxu0 0.0
        %930 = vmatpush1.msra.mxu0 0.0
        %931 = vmatprep.subr.mxu0 0.0
        %932 = vmatpush1.msra.mxu0 0.0
        %933 = vmatprep.subr.mxu0 0.0
        %934 = vmatpush1.msra.mxu0 0.0
        %935 = vmatprep.subr.mxu0 0.0
        %936 = vmatpush1.msra.mxu0 0.0
        %937 = vmatprep.subr.mxu0 0.0
        %938 = vmatpush1.msra.mxu0 0.0
        %939 = vmatprep.subr.mxu0 0.0
        %940 = vmatpush1.msra.mxu0 0.0
        %941 = vmatprep.subr.mxu0 0.0
        %942 = vmatpush1.msra.mxu0 0.0
        %943 = vmatprep.subr.mxu0 0.0
        %944 = vmatpush1.msra.mxu0 0.0
        %945 = vmatprep.subr.mxu0 0.0
        %946 = vmatpush1.msra.mxu0 0.0
        %947 = vmatprep.subr.mxu0 0.0
        %948 = vmatpush1.msra.mxu0 0.0
        %949 = vmatprep.subr.mxu0 0.0
        %950 = vmatpush1.msra.mxu0 0.0
        %951 = vmatprep.subr.mxu0 0.0
        %952 = vmatpush1.msra.mxu0 0.0
        %953 = vmatprep.subr.mxu0 0.0
        %954 = vmatpush1.msra.mxu0 0.0
        %955 = vmatprep.subr.mxu0 0.0
        %956 = vmatpush1.msra.mxu0 0.0
        %957 = vmatprep.mubr.f32.mxu0 0.0
        %958 = vmatmul.mubr.f32.gmra.mrb[0].mxu0 %v891
        %v959 = vpop.f32.mrb[0].mxu0
        %v960 = vadd.f32 %v887, %v959
        %v961 = vpop.f32.mrb[0].mxu0
        %962 = vdwg.mxu0
        %963 = vrot.lane.b32.xlu0 %v484, 112
        %v964 = vpop.permute.xlu0 %963
        %965 = vrot.lane.b32.xlu0 %v484, 80
        %v966 = vpop.permute.xlu0 %965
        %v967 = vsel %vm490, %v964, 0
        %v969 = vsel %vm490, %v966, 0
        %971 = vmatprep.subr.mxu0 0.0
        %972 = vmatpush1.xpose.msra.mxu0 %v969
        %973 = vmatprep.subr.mxu0 0.0
        %974 = vmatpush1.xpose.msra.mxu0 0.0
        %975 = vmatprep.subr.mxu0 0.0
        %976 = vmatpush1.xpose.msra.mxu0 0.0
        %977 = vmatprep.subr.mxu0 0.0
        %978 = vmatpush1.xpose.msra.mxu0 0.0
        %979 = vmatprep.subr.mxu0 0.0
        %980 = vmatpush1.xpose.msra.mxu0 0.0
        %981 = vmatprep.subr.mxu0 0.0
        %982 = vmatpush1.xpose.msra.mxu0 0.0
        %983 = vmatprep.subr.mxu0 0.0
        %984 = vmatpush1.xpose.msra.mxu0 0.0
        %985 = vmatprep.subr.mxu0 0.0
        %986 = vmatpush1.xpose.msra.mxu0 0.0
        %987 = vmatprep.subr.mxu0 0.0
        %988 = vmatpush1.xpose.msra.mxu0 0.0
        %989 = vmatprep.subr.mxu0 0.0
        %990 = vmatpush1.xpose.msra.mxu0 0.0
        %991 = vmatprep.subr.mxu0 0.0
        %992 = vmatpush1.xpose.msra.mxu0 0.0
        %993 = vmatprep.subr.mxu0 0.0
        %994 = vmatpush1.xpose.msra.mxu0 0.0
        %995 = vmatprep.subr.mxu0 0.0
        %996 = vmatpush1.xpose.msra.mxu0 0.0
        %997 = vmatprep.subr.mxu0 0.0
        %998 = vmatpush1.xpose.msra.mxu0 0.0
        %999 = vmatprep.subr.mxu0 0.0
        %1000 = vmatpush1.xpose.msra.mxu0 0.0
        %1001 = vmatprep.subr.mxu0 0.0
        %1002 = vmatpush1.xpose.msra.mxu0 0.0
        %1003 = vmatprep.subr.mxu0 0.0
        %1004 = vmatpush1.xpose.msra.mxu0 0.0
        %1005 = vmatprep.subr.mxu0 0.0
        %1006 = vmatpush1.xpose.msra.mxu0 0.0
        %1007 = vmatprep.subr.mxu0 0.0
        %1008 = vmatpush1.xpose.msra.mxu0 0.0
        %1009 = vmatprep.subr.mxu0 0.0
        %1010 = vmatpush1.xpose.msra.mxu0 0.0
        %1011 = vmatprep.subr.mxu0 0.0
        %1012 = vmatpush1.xpose.msra.mxu0 0.0
        %1013 = vmatprep.subr.mxu0 0.0
        %1014 = vmatpush1.xpose.msra.mxu0 0.0
        %1015 = vmatprep.subr.mxu0 0.0
        %1016 = vmatpush1.xpose.msra.mxu0 0.0
        %1017 = vmatprep.subr.mxu0 0.0
        %1018 = vmatpush1.xpose.msra.mxu0 0.0
        %1019 = vmatprep.subr.mxu0 0.0
        %1020 = vmatpush1.xpose.msra.mxu0 0.0
        %1021 = vmatprep.subr.mxu0 0.0
        %1022 = vmatpush1.xpose.msra.mxu0 0.0
        %1023 = vmatprep.subr.mxu0 0.0
        %1024 = vmatpush1.xpose.msra.mxu0 0.0
        %1025 = vmatprep.subr.mxu0 0.0
        %1026 = vmatpush1.xpose.msra.mxu0 0.0
        %1027 = vmatprep.subr.mxu0 0.0
        %1028 = vmatpush1.xpose.msra.mxu0 0.0
        %1029 = vmatprep.subr.mxu0 0.0
        %1030 = vmatpush1.xpose.msra.mxu0 0.0
        %1031 = vmatprep.subr.mxu0 0.0
        %1032 = vmatpush1.xpose.msra.mxu0 0.0
        %1033 = vmatprep.subr.mxu0 0.0
        %1034 = vmatpush1.xpose.msra.mxu0 0.0
        %1035 = vmatprep.mubr.f32.mxu0 0.0
        %1036 = vmatmul.mubr.f32.gmra.mrb[0].mxu0 %v967
        %v1037 = vpop.f32.mrb[0].mxu0
        %v1038 = vadd.f32 0.0, %v1037
        %v1039 = vpop.f32.mrb[0].mxu0
        %1040 = vdwg.mxu0
        %v1041 = vsel %vm490, %v1038, -inf
        %1042 = vmax.xlane.f32.xlu0 %v1041
        %v1043 = vpop.xlane.xlu0 %1042
        %v1044 = vsub.f32 %v1038, %v1043
        %v1045 = vmul.f32 %v1044, 1.442695
        %v1046 = vpow.pop %v1045
        %v1047 = vsel %vm490, %v1046, 0.0
        %1048 = vadd.xlane.f32.xlu0 %v1047
        %v1049 = vpop.xlane.xlu0 %1048
        %v1050 = vrcp.pop %v1049
        %v1051 = vmul.f32 %v1046, %v1050
        %1052 = vrot.lane.b32.xlu0 %v484, 48
        %v1053 = vpop.permute.xlu0 %1052
        %v1056 = vsel %vm490, %v1051, 0
        %1058 = vmatprep.subr.mxu0 0.0
        %1059 = vmatpush1.msra.mxu0 %v1053
        %1060 = vmatprep.subr.mxu0 0.0
        %1061 = vmatpush1.msra.mxu0 0.0
        %1062 = vmatprep.subr.mxu0 0.0
        %1063 = vmatpush1.msra.mxu0 0.0
        %1064 = vmatprep.subr.mxu0 0.0
        %1065 = vmatpush1.msra.mxu0 0.0
        %1066 = vmatprep.subr.mxu0 0.0
        %1067 = vmatpush1.msra.mxu0 0.0
        %1068 = vmatprep.subr.mxu0 0.0
        %1069 = vmatpush1.msra.mxu0 0.0
        %1070 = vmatprep.subr.mxu0 0.0
        %1071 = vmatpush1.msra.mxu0 0.0
        %1072 = vmatprep.subr.mxu0 0.0
        %1073 = vmatpush1.msra.mxu0 0.0
        %1074 = vmatprep.subr.mxu0 0.0
        %1075 = vmatpush1.msra.mxu0 0.0
        %1076 = vmatprep.subr.mxu0 0.0
        %1077 = vmatpush1.msra.mxu0 0.0
        %1078 = vmatprep.subr.mxu0 0.0
        %1079 = vmatpush1.msra.mxu0 0.0
        %1080 = vmatprep.subr.mxu0 0.0
        %1081 = vmatpush1.msra.mxu0 0.0
        %1082 = vmatprep.subr.mxu0 0.0
        %1083 = vmatpush1.msra.mxu0 0.0
        %1084 = vmatprep.subr.mxu0 0.0
        %1085 = vmatpush1.msra.mxu0 0.0
        %1086 = vmatprep.subr.mxu0 0.0
        %1087 = vmatpush1.msra.mxu0 0.0
        %1088 = vmatprep.subr.mxu0 0.0
        %1089 = vmatpush1.msra.mxu0 0.0
        %1090 = vmatprep.subr.mxu0 0.0
        %1091 = vmatpush1.msra.mxu0 0.0
        %1092 = vmatprep.subr.mxu0 0.0
        %1093 = vmatpush1.msra.mxu0 0.0
        %1094 = vmatprep.subr.mxu0 0.0
        %1095 = vmatpush1.msra.mxu0 0.0
        %1096 = vmatprep.subr.mxu0 0.0
        %1097 = vmatpush1.msra.mxu0 0.0
        %1098 = vmatprep.subr.mxu0 0.0
        %1099 = vmatpush1.msra.mxu0 0.0
        %1100 = vmatprep.subr.mxu0 0.0
        %1101 = vmatpush1.msra.mxu0 0.0
        %1102 = vmatprep.subr.mxu0 0.0
        %1103 = vmatpush1.msra.mxu0 0.0
        %1104 = vmatprep.subr.mxu0 0.0
        %1105 = vmatpush1.msra.mxu0 0.0
        %1106 = vmatprep.subr.mxu0 0.0
        %1107 = vmatpush1.msra.mxu0 0.0
        %1108 = vmatprep.subr.mxu0 0.0
        %1109 = vmatpush1.msra.mxu0 0.0
        %1110 = vmatprep.subr.mxu0 0.0
        %1111 = vmatpush1.msra.mxu0 0.0
        %1112 = vmatprep.subr.mxu0 0.0
        %1113 = vmatpush1.msra.mxu0 0.0
        %1114 = vmatprep.subr.mxu0 0.0
        %1115 = vmatpush1.msra.mxu0 0.0
        %1116 = vmatprep.subr.mxu0 0.0
        %1117 = vmatpush1.msra.mxu0 0.0
        %1118 = vmatprep.subr.mxu0 0.0
        %1119 = vmatpush1.msra.mxu0 0.0
        %1120 = vmatprep.subr.mxu0 0.0
        %1121 = vmatpush1.msra.mxu0 0.0
        %1122 = vmatprep.mubr.f32.mxu0 0.0
        %1123 = vmatmul.mubr.f32.gmra.mrb[0].mxu0 %v1056
        %v1124 = vpop.f32.mrb[0].mxu0
        %v1125 = vadd.f32 0.0, %v1124
        %v1126 = vpop.f32.mrb[0].mxu0
        %1127 = vdwg.mxu0
        %v1129 = vsel %vm490, %v1125, 0
        %1131 = vmatprep.subr.mxu0 0.0
        %1132 = vmatpush1.msra.mxu0 %v404
        %1133 = vmatprep.subr.mxu0 0.0
        %1134 = vmatpush1.msra.mxu0 0.0
        %1135 = vmatprep.subr.mxu0 0.0
        %1136 = vmatpush1.msra.mxu0 0.0
        %1137 = vmatprep.subr.mxu0 0.0
        %1138 = vmatpush1.msra.mxu0 0.0
        %1139 = vmatprep.subr.mxu0 0.0
        %1140 = vmatpush1.msra.mxu0 0.0
        %1141 = vmatprep.subr.mxu0 0.0
        %1142 = vmatpush1.msra.mxu0 0.0
        %1143 = vmatprep.subr.mxu0 0.0
        %1144 = vmatpush1.msra.mxu0 0.0
        %1145 = vmatprep.subr.mxu0 0.0
        %1146 = vmatpush1.msra.mxu0 0.0
        %1147 = vmatprep.subr.mxu0 0.0
        %1148 = vmatpush1.msra.mxu0 0.0
        %1149 = vmatprep.subr.mxu0 0.0
        %1150 = vmatpush1.msra.mxu0 0.0
        %1151 = vmatprep.subr.mxu0 0.0
        %1152 = vmatpush1.msra.mxu0 0.0
        %1153 = vmatprep.subr.mxu0 0.0
        %1154 = vmatpush1.msra.mxu0 0.0
        %1155 = vmatprep.subr.mxu0 0.0
        %1156 = vmatpush1.msra.mxu0 0.0
        %1157 = vmatprep.subr.mxu0 0.0
        %1158 = vmatpush1.msra.mxu0 0.0
        %1159 = vmatprep.subr.mxu0 0.0
        %1160 = vmatpush1.msra.mxu0 0.0
        %1161 = vmatprep.subr.mxu0 0.0
        %1162 = vmatpush1.msra.mxu0 0.0
        %1163 = vmatprep.subr.mxu0 0.0
        %1164 = vmatpush1.msra.mxu0 0.0
        %1165 = vmatprep.subr.mxu0 0.0
        %1166 = vmatpush1.msra.mxu0 0.0
        %1167 = vmatprep.subr.mxu0 0.0
        %1168 = vmatpush1.msra.mxu0 0.0
        %1169 = vmatprep.subr.mxu0 0.0
        %1170 = vmatpush1.msra.mxu0 0.0
        %1171 = vmatprep.subr.mxu0 0.0
        %1172 = vmatpush1.msra.mxu0 0.0
        %1173 = vmatprep.subr.mxu0 0.0
        %1174 = vmatpush1.msra.mxu0 0.0
        %1175 = vmatprep.subr.mxu0 0.0
        %1176 = vmatpush1.msra.mxu0 0.0
        %1177 = vmatprep.subr.mxu0 0.0
        %1178 = vmatpush1.msra.mxu0 0.0
        %1179 = vmatprep.subr.mxu0 0.0
        %1180 = vmatpush1.msra.mxu0 0.0
        %1181 = vmatprep.subr.mxu0 0.0
        %1182 = vmatpush1.msra.mxu0 0.0
        %1183 = vmatprep.subr.mxu0 0.0
        %1184 = vmatpush1.msra.mxu0 0.0
        %1185 = vmatprep.subr.mxu0 0.0
        %1186 = vmatpush1.msra.mxu0 0.0
        %1187 = vmatprep.subr.mxu0 0.0
        %1188 = vmatpush1.msra.mxu0 0.0
        %1189 = vmatprep.subr.mxu0 0.0
        %1190 = vmatpush1.msra.mxu0 0.0
        %1191 = vmatprep.subr.mxu0 0.0
        %1192 = vmatpush1.msra.mxu0 0.0
        %1193 = vmatprep.subr.mxu0 0.0
        %1194 = vmatpush1.msra.mxu0 0.0
        %1195 = vmatprep.mubr.f32.mxu0 0.0
        %1196 = vmatmul.mubr.f32.gmra.mrb[0].mxu0 %v1129
        %v1197 = vpop.f32.mrb[0].mxu0
        %v1198 = vadd.f32 0.0, %v1197
        %v1199 = vpop.f32.mrb[0].mxu0
        %1200 = vdwg.mxu0
        %v1201 = vadd.f32 %v960, %v1198
        %1202 = vrot.lane.b32.xlu0 %v484, 104
        %v1203 = vpop.permute.xlu0 %1202
        %1204 = vrot.lane.b32.xlu0 %v484, 72
        %v1205 = vpop.permute.xlu0 %1204
        %v1206 = vsel %vm490, %v1203, 0
        %v1208 = vsel %vm490, %v1205, 0
        %1210 = vmatprep.subr.mxu0 0.0
        %1211 = vmatpush1.xpose.msra.mxu0 %v1208
        %1212 = vmatprep.subr.mxu0 0.0
        %1213 = vmatpush1.xpose.msra.mxu0 0.0
        %1214 = vmatprep.subr.mxu0 0.0
        %1215 = vmatpush1.xpose.msra.mxu0 0.0
        %1216 = vmatprep.subr.mxu0 0.0
        %1217 = vmatpush1.xpose.msra.mxu0 0.0
        %1218 = vmatprep.subr.mxu0 0.0
        %1219 = vmatpush1.xpose.msra.mxu0 0.0
        %1220 = vmatprep.subr.mxu0 0.0
        %1221 = vmatpush1.xpose.msra.mxu0 0.0
        %1222 = vmatprep.subr.mxu0 0.0
        %1223 = vmatpush1.xpose.msra.mxu0 0.0
        %1224 = vmatprep.subr.mxu0 0.0
        %1225 = vmatpush1.xpose.msra.mxu0 0.0
        %1226 = vmatprep.subr.mxu0 0.0
        %1227 = vmatpush1.xpose.msra.mxu0 0.0
        %1228 = vmatprep.subr.mxu0 0.0
        %1229 = vmatpush1.xpose.msra.mxu0 0.0
        %1230 = vmatprep.subr.mxu0 0.0
        %1231 = vmatpush1.xpose.msra.mxu0 0.0
        %1232 = vmatprep.subr.mxu0 0.0
        %1233 = vmatpush1.xpose.msra.mxu0 0.0
        %1234 = vmatprep.subr.mxu0 0.0
        %1235 = vmatpush1.xpose.msra.mxu0 0.0
        %1236 = vmatprep.subr.mxu0 0.0
        %1237 = vmatpush1.xpose.msra.mxu0 0.0
        %1238 = vmatprep.subr.mxu0 0.0
        %1239 = vmatpush1.xpose.msra.mxu0 0.0
        %1240 = vmatprep.subr.mxu0 0.0
        %1241 = vmatpush1.xpose.msra.mxu0 0.0
        %1242 = vmatprep.subr.mxu0 0.0
        %1243 = vmatpush1.xpose.msra.mxu0 0.0
        %1244 = vmatprep.subr.mxu0 0.0
        %1245 = vmatpush1.xpose.msra.mxu0 0.0
        %1246 = vmatprep.subr.mxu0 0.0
        %1247 = vmatpush1.xpose.msra.mxu0 0.0
        %1248 = vmatprep.subr.mxu0 0.0
        %1249 = vmatpush1.xpose.msra.mxu0 0.0
        %1250 = vmatprep.subr.mxu0 0.0
        %1251 = vmatpush1.xpose.msra.mxu0 0.0
        %1252 = vmatprep.subr.mxu0 0.0
        %1253 = vmatpush1.xpose.msra.mxu0 0.0
        %1254 = vmatprep.subr.mxu0 0.0
        %1255 = vmatpush1.xpose.msra.mxu0 0.0
        %1256 = vmatprep.subr.mxu0 0.0
        %1257 = vmatpush1.xpose.msra.mxu0 0.0
        %1258 = vmatprep.subr.mxu0 0.0
        %1259 = vmatpush1.xpose.msra.mxu0 0.0
        %1260 = vmatprep.subr.mxu0 0.0
        %1261 = vmatpush1.xpose.msra.mxu0 0.0
        %1262 = vmatprep.subr.mxu0 0.0
        %1263 = vmatpush1.xpose.msra.mxu0 0.0
        %1264 = vmatprep.subr.mxu0 0.0
        %1265 = vmatpush1.xpose.msra.mxu0 0.0
        %1266 = vmatprep.subr.mxu0 0.0
        %1267 = vmatpush1.xpose.msra.mxu0 0.0
        %1268 = vmatprep.subr.mxu0 0.0
        %1269 = vmatpush1.xpose.msra.mxu0 0.0
        %1270 = vmatprep.subr.mxu0 0.0
        %1271 = vmatpush1.xpose.msra.mxu0 0.0
        %1272 = vmatprep.subr.mxu0 0.0
        %1273 = vmatpush1.xpose.msra.mxu0 0.0
        %1274 = vmatprep.mubr.f32.mxu0 0.0
        %1275 = vmatmul.mubr.f32.gmra.mrb[0].mxu0 %v1206
        %v1276 = vpop.f32.mrb[0].mxu0
        %v1277 = vadd.f32 0.0, %v1276
        %v1278 = vpop.f32.mrb[0].mxu0
        %1279 = vdwg.mxu0
        %v1280 = vsel %vm490, %v1277, -inf
        %1281 = vmax.xlane.f32.xlu0 %v1280
        %v1282 = vpop.xlane.xlu0 %1281
        %v1283 = vsub.f32 %v1277, %v1282
        %v1284 = vmul.f32 %v1283, 1.442695
        %v1285 = vpow.pop %v1284
        %v1286 = vsel %vm490, %v1285, 0.0
        %1287 = vadd.xlane.f32.xlu0 %v1286
        %v1288 = vpop.xlane.xlu0 %1287
        %v1289 = vrcp.pop %v1288
        %v1290 = vmul.f32 %v1285, %v1289
        %1291 = vrot.lane.b32.xlu0 %v484, 40
        %v1292 = vpop.permute.xlu0 %1291
        %v1295 = vsel %vm490, %v1290, 0
        %1297 = vmatprep.subr.mxu0 0.0
        %1298 = vmatpush1.msra.mxu0 %v1292
        %1299 = vmatprep.subr.mxu0 0.0
        %1300 = vmatpush1.msra.mxu0 0.0
        %1301 = vmatprep.subr.mxu0 0.0
        %1302 = vmatpush1.msra.mxu0 0.0
        %1303 = vmatprep.subr.mxu0 0.0
        %1304 = vmatpush1.msra.mxu0 0.0
        %1305 = vmatprep.subr.mxu0 0.0
        %1306 = vmatpush1.msra.mxu0 0.0
        %1307 = vmatprep.subr.mxu0 0.0
        %1308 = vmatpush1.msra.mxu0 0.0
        %1309 = vmatprep.subr.mxu0 0.0
        %1310 = vmatpush1.msra.mxu0 0.0
        %1311 = vmatprep.subr.mxu0 0.0
        %1312 = vmatpush1.msra.mxu0 0.0
        %1313 = vmatprep.subr.mxu0 0.0
        %1314 = vmatpush1.msra.mxu0 0.0
        %1315 = vmatprep.subr.mxu0 0.0
        %1316 = vmatpush1.msra.mxu0 0.0
        %1317 = vmatprep.subr.mxu0 0.0
        %1318 = vmatpush1.msra.mxu0 0.0
        %1319 = vmatprep.subr.mxu0 0.0
        %1320 = vmatpush1.msra.mxu0 0.0
        %1321 = vmatprep.subr.mxu0 0.0
        %1322 = vmatpush1.msra.mxu0 0.0
        %1323 = vmatprep.subr.mxu0 0.0
        %1324 = vmatpush1.msra.mxu0 0.0
        %1325 = vmatprep.subr.mxu0 0.0
        %1326 = vmatpush1.msra.mxu0 0.0
        %1327 = vmatprep.subr.mxu0 0.0
        %1328 = vmatpush1.msra.mxu0 0.0
        %1329 = vmatprep.subr.mxu0 0.0
        %1330 = vmatpush1.msra.mxu0 0.0
        %1331 = vmatprep.subr.mxu0 0.0
        %1332 = vmatpush1.msra.mxu0 0.0
        %1333 = vmatprep.subr.mxu0 0.0
        %1334 = vmatpush1.msra.mxu0 0.0
        %1335 = vmatprep.subr.mxu0 0.0
        %1336 = vmatpush1.msra.mxu0 0.0
        %1337 = vmatprep.subr.mxu0 0.0
        %1338 = vmatpush1.msra.mxu0 0.0
        %1339 = vmatprep.subr.mxu0 0.0
        %1340 = vmatpush1.msra.mxu0 0.0
        %1341 = vmatprep.subr.mxu0 0.0
        %1342 = vmatpush1.msra.mxu0 0.0
        %1343 = vmatprep.subr.mxu0 0.0
        %1344 = vmatpush1.msra.mxu0 0.0
        %1345 = vmatprep.subr.mxu0 0.0
        %1346 = vmatpush1.msra.mxu0 0.0
        %1347 = vmatprep.subr.mxu0 0.0
        %1348 = vmatpush1.msra.mxu0 0.0
        %1349 = vmatprep.subr.mxu0 0.0
        %1350 = vmatpush1.msra.mxu0 0.0
        %1351 = vmatprep.subr.mxu0 0.0
        %1352 = vmatpush1.msra.mxu0 0.0
        %1353 = vmatprep.subr.mxu0 0.0
        %1354 = vmatpush1.msra.mxu0 0.0
        %1355 = vmatprep.subr.mxu0 0.0
        %1356 = vmatpush1.msra.mxu0 0.0
        %1357 = vmatprep.subr.mxu0 0.0
        %1358 = vmatpush1.msra.mxu0 0.0
        %1359 = vmatprep.subr.mxu0 0.0
        %1360 = vmatpush1.msra.mxu0 0.0
        %1361 = vmatprep.mubr.f32.mxu0 0.0
        %1362 = vmatmul.mubr.f32.gmra.mrb[0].mxu0 %v1295
        %v1363 = vpop.f32.mrb[0].mxu0
        %v1364 = vadd.f32 0.0, %v1363
        %v1365 = vpop.f32.mrb[0].mxu0
        %1366 = vdwg.mxu0
        %v1368 = vsel %vm490, %v1364, 0
        %1370 = vmatprep.subr.mxu0 0.0
        %1371 = vmatpush1.msra.mxu0 %v405
        %1372 = vmatprep.subr.mxu0 0.0
        %1373 = vmatpush1.msra.mxu0 0.0
        %1374 = vmatprep.subr.mxu0 0.0
        %1375 = vmatpush1.msra.mxu0 0.0
        %1376 = vmatprep.subr.mxu0 0.0
        %1377 = vmatpush1.msra.mxu0 0.0
        %1378 = vmatprep.subr.mxu0 0.0
        %1379 = vmatpush1.msra.mxu0 0.0
        %1380 = vmatprep.subr.mxu0 0.0
        %1381 = vmatpush1.msra.mxu0 0.0
        %1382 = vmatprep.subr.mxu0 0.0
        %1383 = vmatpush1.msra.mxu0 0.0
        %1384 = vmatprep.subr.mxu0 0.0
        %1385 = vmatpush1.msra.mxu0 0.0
        %1386 = vmatprep.subr.mxu0 0.0
        %1387 = vmatpush1.msra.mxu0 0.0
        %1388 = vmatprep.subr.mxu0 0.0
        %1389 = vmatpush1.msra.mxu0 0.0
        %1390 = vmatprep.subr.mxu0 0.0
        %1391 = vmatpush1.msra.mxu0 0.0
        %1392 = vmatprep.subr.mxu0 0.0
        %1393 = vmatpush1.msra.mxu0 0.0
        %1394 = vmatprep.subr.mxu0 0.0
        %1395 = vmatpush1.msra.mxu0 0.0
        %1396 = vmatprep.subr.mxu0 0.0
        %1397 = vmatpush1.msra.mxu0 0.0
        %1398 = vmatprep.subr.mxu0 0.0
        %1399 = vmatpush1.msra.mxu0 0.0
        %1400 = vmatprep.subr.mxu0 0.0
        %1401 = vmatpush1.msra.mxu0 0.0
        %1402 = vmatprep.subr.mxu0 0.0
        %1403 = vmatpush1.msra.mxu0 0.0
        %1404 = vmatprep.subr.mxu0 0.0
        %1405 = vmatpush1.msra.mxu0 0.0
        %1406 = vmatprep.subr.mxu0 0.0
        %1407 = vmatpush1.msra.mxu0 0.0
        %1408 = vmatprep.subr.mxu0 0.0
        %1409 = vmatpush1.msra.mxu0 0.0
        %1410 = vmatprep.subr.mxu0 0.0
        %1411 = vmatpush1.msra.mxu0 0.0
        %1412 = vmatprep.subr.mxu0 0.0
        %1413 = vmatpush1.msra.mxu0 0.0
        %1414 = vmatprep.subr.mxu0 0.0
        %1415 = vmatpush1.msra.mxu0 0.0
        %1416 = vmatprep.subr.mxu0 0.0
        %1417 = vmatpush1.msra.mxu0 0.0
        %1418 = vmatprep.subr.mxu0 0.0
        %1419 = vmatpush1.msra.mxu0 0.0
        %1420 = vmatprep.subr.mxu0 0.0
        %1421 = vmatpush1.msra.mxu0 0.0
        %1422 = vmatprep.subr.mxu0 0.0
        %1423 = vmatpush1.msra.mxu0 0.0
        %1424 = vmatprep.subr.mxu0 0.0
        %1425 = vmatpush1.msra.mxu0 0.0
        %1426 = vmatprep.subr.mxu0 0.0
        %1427 = vmatpush1.msra.mxu0 0.0
        %1428 = vmatprep.subr.mxu0 0.0
        %1429 = vmatpush1.msra.mxu0 0.0
        %1430 = vmatprep.subr.mxu0 0.0
        %1431 = vmatpush1.msra.mxu0 0.0
        %1432 = vmatprep.subr.mxu0 0.0
        %1433 = vmatpush1.msra.mxu0 0.0
        %1434 = vmatprep.mubr.f32.mxu0 0.0
        %1435 = vmatmul.mubr.f32.gmra.mrb[0].mxu0 %v1368
        %v1436 = vpop.f32.mrb[0].mxu0
        %v1437 = vadd.f32 0.0, %v1436
        %v1438 = vpop.f32.mrb[0].mxu0
        %1439 = vdwg.mxu0
        %v1440 = vadd.f32 %v1201, %v1437
        %v1442 = vlaneseq
        %v1443 = vshrl.u32 %v1442, 7
        %v1444 = vsub.s32 0, %v1443
        %v1445 = vrot.slane %v406, %v1444
        %v1447 = vadd.f32 %v1440, %v1445
        %s1448 = scalar_lea.vmem %s377, 32
        %v1449 = vld [vmem:[%s1448] sm:$0xff]
        %v1450 = vld [vmem:[%s1448 + $0x8] sm:$0xff]
        %v1451 = vld [vmem:[%s1448 + $0x10] sm:$0xff]
        %v1452 = vld [vmem:[%s1448 + $0x18] sm:$0xff]
        %s1453 = scalar_lea.vmem %s381, 1
        %v1454 = vld [vmem:[%s1453] sm:$0x1]
        %s1455 = scalar_lea.vmem %s316, 32 [#allocation2]
        %v1456 = vld [vmem:[%s1455] sm:$0xff]
        %v1457 = vld [vmem:[%s1455 + $0x8] sm:$0xff]
        %v1458 = vld [vmem:[%s1455 + $0x10] sm:$0xff]
        %v1459 = vld [vmem:[%s1455 + $0x18] sm:$0xff]
        %s1460 = scalar_lea.vmem %s385, 1
        %v1461 = vld [vmem:[%s1460] sm:$0x1]
        %v1463 = vlaneseq
        %v1464 = vshrl.u32 %v1463, 7
        %v1465 = vsub.s32 0, %v1464
        %v1466 = vrot.slane %v1454, %v1465
        %v1469 = vsel %vm413, %v1447, 0
        %1471 = vmatprep.subr.mxu0 0.0
        %1472 = vmatpush1.msra.mxu0 %v1449
        %1473 = vmatprep.subr.mxu0 0.0
        %1474 = vmatpush1.msra.mxu0 %v1450
        %1475 = vmatprep.subr.mxu0 0.0
        %1476 = vmatpush1.msra.mxu0 %v1451
        %1477 = vmatprep.subr.mxu0 0.0
        %1478 = vmatpush1.msra.mxu0 %v1452
        %1479 = vmatprep.subr.mxu0 0.0
        %1480 = vmatpush1.msra.mxu0 0.0
        %1481 = vmatprep.subr.mxu0 0.0
        %1482 = vmatpush1.msra.mxu0 0.0
        %1483 = vmatprep.subr.mxu0 0.0
        %1484 = vmatpush1.msra.mxu0 0.0
        %1485 = vmatprep.subr.mxu0 0.0
        %1486 = vmatpush1.msra.mxu0 0.0
        %1487 = vmatprep.subr.mxu0 0.0
        %1488 = vmatpush1.msra.mxu0 0.0
        %1489 = vmatprep.subr.mxu0 0.0
        %1490 = vmatpush1.msra.mxu0 0.0
        %1491 = vmatprep.subr.mxu0 0.0
        %1492 = vmatpush1.msra.mxu0 0.0
        %1493 = vmatprep.subr.mxu0 0.0
        %1494 = vmatpush1.msra.mxu0 0.0
        %1495 = vmatprep.subr.mxu0 0.0
        %1496 = vmatpush1.msra.mxu0 0.0
        %1497 = vmatprep.subr.mxu0 0.0
        %1498 = vmatpush1.msra.mxu0 0.0
        %1499 = vmatprep.subr.mxu0 0.0
        %1500 = vmatpush1.msra.mxu0 0.0
        %1501 = vmatprep.subr.mxu0 0.0
        %1502 = vmatpush1.msra.mxu0 0.0
        %1503 = vmatprep.subr.mxu0 0.0
        %1504 = vmatpush1.msra.mxu0 0.0
        %1505 = vmatprep.subr.mxu0 0.0
        %1506 = vmatpush1.msra.mxu0 0.0
        %1507 = vmatprep.subr.mxu0 0.0
        %1508 = vmatpush1.msra.mxu0 0.0
        %1509 = vmatprep.subr.mxu0 0.0
        %1510 = vmatpush1.msra.mxu0 0.0
        %1511 = vmatprep.subr.mxu0 0.0
        %1512 = vmatpush1.msra.mxu0 0.0
        %1513 = vmatprep.subr.mxu0 0.0
        %1514 = vmatpush1.msra.mxu0 0.0
        %1515 = vmatprep.subr.mxu0 0.0
        %1516 = vmatpush1.msra.mxu0 0.0
        %1517 = vmatprep.subr.mxu0 0.0
        %1518 = vmatpush1.msra.mxu0 0.0
        %1519 = vmatprep.subr.mxu0 0.0
        %1520 = vmatpush1.msra.mxu0 0.0
        %1521 = vmatprep.subr.mxu0 0.0
        %1522 = vmatpush1.msra.mxu0 0.0
        %1523 = vmatprep.subr.mxu0 0.0
        %1524 = vmatpush1.msra.mxu0 0.0
        %1525 = vmatprep.subr.mxu0 0.0
        %1526 = vmatpush1.msra.mxu0 0.0
        %1527 = vmatprep.subr.mxu0 0.0
        %1528 = vmatpush1.msra.mxu0 0.0
        %1529 = vmatprep.subr.mxu0 0.0
        %1530 = vmatpush1.msra.mxu0 0.0
        %1531 = vmatprep.subr.mxu0 0.0
        %1532 = vmatpush1.msra.mxu0 0.0
        %1533 = vmatprep.subr.mxu0 0.0
        %1534 = vmatpush1.msra.mxu0 0.0
        %1535 = vmatprep.mubr.f32.mxu0 0.0
        %1536 = vmatmul.mubr.f32.gmra.mrb[0].mxu0 %v1469
        %v1537 = vpop.f32.mrb[0].mxu0
        %v1538 = vadd.f32 %v1466, %v1537
        %v1539 = vpop.f32.mrb[0].mxu0
        %1540 = vdwg.mxu0
        %1542 = vrot.lane.b32.xlu0 %v1538, 96
        %v1543 = vpop.permute.xlu0 %1542
        %v1544 = vsel %vm490, %v1538, 0
        %v1546 = vsel %vm490, %v1543, 0
        %1548 = vmatprep.subr.mxu0 0.0
        %1549 = vmatpush1.xpose.msra.mxu0 %v1546
        %1550 = vmatprep.subr.mxu0 0.0
        %1551 = vmatpush1.xpose.msra.mxu0 0.0
        %1552 = vmatprep.subr.mxu0 0.0
        %1553 = vmatpush1.xpose.msra.mxu0 0.0
        %1554 = vmatprep.subr.mxu0 0.0
        %1555 = vmatpush1.xpose.msra.mxu0 0.0
        %1556 = vmatprep.subr.mxu0 0.0
        %1557 = vmatpush1.xpose.msra.mxu0 0.0
        %1558 = vmatprep.subr.mxu0 0.0
        %1559 = vmatpush1.xpose.msra.mxu0 0.0
        %1560 = vmatprep.subr.mxu0 0.0
        %1561 = vmatpush1.xpose.msra.mxu0 0.0
        %1562 = vmatprep.subr.mxu0 0.0
        %1563 = vmatpush1.xpose.msra.mxu0 0.0
        %1564 = vmatprep.subr.mxu0 0.0
        %1565 = vmatpush1.xpose.msra.mxu0 0.0
        %1566 = vmatprep.subr.mxu0 0.0
        %1567 = vmatpush1.xpose.msra.mxu0 0.0
        %1568 = vmatprep.subr.mxu0 0.0
        %1569 = vmatpush1.xpose.msra.mxu0 0.0
        %1570 = vmatprep.subr.mxu0 0.0
        %1571 = vmatpush1.xpose.msra.mxu0 0.0
        %1572 = vmatprep.subr.mxu0 0.0
        %1573 = vmatpush1.xpose.msra.mxu0 0.0
        %1574 = vmatprep.subr.mxu0 0.0
        %1575 = vmatpush1.xpose.msra.mxu0 0.0
        %1576 = vmatprep.subr.mxu0 0.0
        %1577 = vmatpush1.xpose.msra.mxu0 0.0
        %1578 = vmatprep.subr.mxu0 0.0
        %1579 = vmatpush1.xpose.msra.mxu0 0.0
        %1580 = vmatprep.subr.mxu0 0.0
        %1581 = vmatpush1.xpose.msra.mxu0 0.0
        %1582 = vmatprep.subr.mxu0 0.0
        %1583 = vmatpush1.xpose.msra.mxu0 0.0
        %1584 = vmatprep.subr.mxu0 0.0
        %1585 = vmatpush1.xpose.msra.mxu0 0.0
        %1586 = vmatprep.subr.mxu0 0.0
        %1587 = vmatpush1.xpose.msra.mxu0 0.0
        %1588 = vmatprep.subr.mxu0 0.0
        %1589 = vmatpush1.xpose.msra.mxu0 0.0
        %1590 = vmatprep.subr.mxu0 0.0
        %1591 = vmatpush1.xpose.msra.mxu0 0.0
        %1592 = vmatprep.subr.mxu0 0.0
        %1593 = vmatpush1.xpose.msra.mxu0 0.0
        %1594 = vmatprep.subr.mxu0 0.0
        %1595 = vmatpush1.xpose.msra.mxu0 0.0
        %1596 = vmatprep.subr.mxu0 0.0
        %1597 = vmatpush1.xpose.msra.mxu0 0.0
        %1598 = vmatprep.subr.mxu0 0.0
        %1599 = vmatpush1.xpose.msra.mxu0 0.0
        %1600 = vmatprep.subr.mxu0 0.0
        %1601 = vmatpush1.xpose.msra.mxu0 0.0
        %1602 = vmatprep.subr.mxu0 0.0
        %1603 = vmatpush1.xpose.msra.mxu0 0.0
        %1604 = vmatprep.subr.mxu0 0.0
        %1605 = vmatpush1.xpose.msra.mxu0 0.0
        %1606 = vmatprep.subr.mxu0 0.0
        %1607 = vmatpush1.xpose.msra.mxu0 0.0
        %1608 = vmatprep.subr.mxu0 0.0
        %1609 = vmatpush1.xpose.msra.mxu0 0.0
        %1610 = vmatprep.subr.mxu0 0.0
        %1611 = vmatpush1.xpose.msra.mxu0 0.0
        %1612 = vmatprep.mubr.f32.mxu0 0.0
        %1613 = vmatmul.mubr.f32.gmra.mrb[0].mxu0 %v1544
        %v1614 = vpop.f32.mrb[0].mxu0
        %v1615 = vadd.f32 0.0, %v1614
        %v1616 = vpop.f32.mrb[0].mxu0
        %1617 = vdwg.mxu0
        %v1618 = vsel %vm490, %v1615, -inf
        %1619 = vmax.xlane.f32.xlu0 %v1618
        %v1620 = vpop.xlane.xlu0 %1619
        %v1621 = vsub.f32 %v1615, %v1620
        %v1622 = vmul.f32 %v1621, 1.442695
        %v1623 = vpow.pop %v1622
        %v1624 = vsel %vm490, %v1623, 0.0
        %1625 = vadd.xlane.f32.xlu0 %v1624
        %v1626 = vpop.xlane.xlu0 %1625
        %v1627 = vrcp.pop %v1626
        %v1628 = vmul.f32 %v1623, %v1627
        %1629 = vrot.lane.b32.xlu0 %v1538, 64
        %v1630 = vpop.permute.xlu0 %1629
        %v1633 = vsel %vm490, %v1628, 0
        %1635 = vmatprep.subr.mxu0 0.0
        %1636 = vmatpush1.msra.mxu0 %v1630
        %1637 = vmatprep.subr.mxu0 0.0
        %1638 = vmatpush1.msra.mxu0 0.0
        %1639 = vmatprep.subr.mxu0 0.0
        %1640 = vmatpush1.msra.mxu0 0.0
        %1641 = vmatprep.subr.mxu0 0.0
        %1642 = vmatpush1.msra.mxu0 0.0
        %1643 = vmatprep.subr.mxu0 0.0
        %1644 = vmatpush1.msra.mxu0 0.0
        %1645 = vmatprep.subr.mxu0 0.0
        %1646 = vmatpush1.msra.mxu0 0.0
        %1647 = vmatprep.subr.mxu0 0.0
        %1648 = vmatpush1.msra.mxu0 0.0
        %1649 = vmatprep.subr.mxu0 0.0
        %1650 = vmatpush1.msra.mxu0 0.0
        %1651 = vmatprep.subr.mxu0 0.0
        %1652 = vmatpush1.msra.mxu0 0.0
        %1653 = vmatprep.subr.mxu0 0.0
        %1654 = vmatpush1.msra.mxu0 0.0
        %1655 = vmatprep.subr.mxu0 0.0
        %1656 = vmatpush1.msra.mxu0 0.0
        %1657 = vmatprep.subr.mxu0 0.0
        %1658 = vmatpush1.msra.mxu0 0.0
        %1659 = vmatprep.subr.mxu0 0.0
        %1660 = vmatpush1.msra.mxu0 0.0
        %1661 = vmatprep.subr.mxu0 0.0
        %1662 = vmatpush1.msra.mxu0 0.0
        %1663 = vmatprep.subr.mxu0 0.0
        %1664 = vmatpush1.msra.mxu0 0.0
        %1665 = vmatprep.subr.mxu0 0.0
        %1666 = vmatpush1.msra.mxu0 0.0
        %1667 = vmatprep.subr.mxu0 0.0
        %1668 = vmatpush1.msra.mxu0 0.0
        %1669 = vmatprep.subr.mxu0 0.0
        %1670 = vmatpush1.msra.mxu0 0.0
        %1671 = vmatprep.subr.mxu0 0.0
        %1672 = vmatpush1.msra.mxu0 0.0
        %1673 = vmatprep.subr.mxu0 0.0
        %1674 = vmatpush1.msra.mxu0 0.0
        %1675 = vmatprep.subr.mxu0 0.0
        %1676 = vmatpush1.msra.mxu0 0.0
        %1677 = vmatprep.subr.mxu0 0.0
        %1678 = vmatpush1.msra.mxu0 0.0
        %1679 = vmatprep.subr.mxu0 0.0
        %1680 = vmatpush1.msra.mxu0 0.0
        %1681 = vmatprep.subr.mxu0 0.0
        %1682 = vmatpush1.msra.mxu0 0.0
        %1683 = vmatprep.subr.mxu0 0.0
        %1684 = vmatpush1.msra.mxu0 0.0
        %1685 = vmatprep.subr.mxu0 0.0
        %1686 = vmatpush1.msra.mxu0 0.0
        %1687 = vmatprep.subr.mxu0 0.0
        %1688 = vmatpush1.msra.mxu0 0.0
        %1689 = vmatprep.subr.mxu0 0.0
        %1690 = vmatpush1.msra.mxu0 0.0
        %1691 = vmatprep.subr.mxu0 0.0
        %1692 = vmatpush1.msra.mxu0 0.0
        %1693 = vmatprep.subr.mxu0 0.0
        %1694 = vmatpush1.msra.mxu0 0.0
        %1695 = vmatprep.subr.mxu0 0.0
        %1696 = vmatpush1.msra.mxu0 0.0
        %1697 = vmatprep.subr.mxu0 0.0
        %1698 = vmatpush1.msra.mxu0 0.0
        %1699 = vmatprep.mubr.f32.mxu0 0.0
        %1700 = vmatmul.mubr.f32.gmra.mrb[0].mxu0 %v1633
        %v1701 = vpop.f32.mrb[0].mxu0
        %v1702 = vadd.f32 0.0, %v1701
        %v1703 = vpop.f32.mrb[0].mxu0
        %1704 = vdwg.mxu0
        %1705 = vrot.lane.b32.xlu0 %v1538, 120
        %v1706 = vpop.permute.xlu0 %1705
        %1707 = vrot.lane.b32.xlu0 %v1538, 88
        %v1708 = vpop.permute.xlu0 %1707
        %v1709 = vsel %vm490, %v1706, 0
        %v1711 = vsel %vm490, %v1708, 0
        %1713 = vmatprep.subr.mxu0 0.0
        %1714 = vmatpush1.xpose.msra.mxu0 %v1711
        %1715 = vmatprep.subr.mxu0 0.0
        %1716 = vmatpush1.xpose.msra.mxu0 0.0
        %1717 = vmatprep.subr.mxu0 0.0
        %1718 = vmatpush1.xpose.msra.mxu0 0.0
        %1719 = vmatprep.subr.mxu0 0.0
        %1720 = vmatpush1.xpose.msra.mxu0 0.0
        %1721 = vmatprep.subr.mxu0 0.0
        %1722 = vmatpush1.xpose.msra.mxu0 0.0
        %1723 = vmatprep.subr.mxu0 0.0
        %1724 = vmatpush1.xpose.msra.mxu0 0.0
        %1725 = vmatprep.subr.mxu0 0.0
        %1726 = vmatpush1.xpose.msra.mxu0 0.0
        %1727 = vmatprep.subr.mxu0 0.0
        %1728 = vmatpush1.xpose.msra.mxu0 0.0
        %1729 = vmatprep.subr.mxu0 0.0
        %1730 = vmatpush1.xpose.msra.mxu0 0.0
        %1731 = vmatprep.subr.mxu0 0.0
        %1732 = vmatpush1.xpose.msra.mxu0 0.0
        %1733 = vmatprep.subr.mxu0 0.0
        %1734 = vmatpush1.xpose.msra.mxu0 0.0
        %1735 = vmatprep.subr.mxu0 0.0
        %1736 = vmatpush1.xpose.msra.mxu0 0.0
        %1737 = vmatprep.subr.mxu0 0.0
        %1738 = vmatpush1.xpose.msra.mxu0 0.0
        %1739 = vmatprep.subr.mxu0 0.0
        %1740 = vmatpush1.xpose.msra.mxu0 0.0
        %1741 = vmatprep.subr.mxu0 0.0
        %1742 = vmatpush1.xpose.msra.mxu0 0.0
        %1743 = vmatprep.subr.mxu0 0.0
        %1744 = vmatpush1.xpose.msra.mxu0 0.0
        %1745 = vmatprep.subr.mxu0 0.0
        %1746 = vmatpush1.xpose.msra.mxu0 0.0
        %1747 = vmatprep.subr.mxu0 0.0
        %1748 = vmatpush1.xpose.msra.mxu0 0.0
        %1749 = vmatprep.subr.mxu0 0.0
        %1750 = vmatpush1.xpose.msra.mxu0 0.0
        %1751 = vmatprep.subr.mxu0 0.0
        %1752 = vmatpush1.xpose.msra.mxu0 0.0
        %1753 = vmatprep.subr.mxu0 0.0
        %1754 = vmatpush1.xpose.msra.mxu0 0.0
        %1755 = vmatprep.subr.mxu0 0.0
        %1756 = vmatpush1.xpose.msra.mxu0 0.0
        %1757 = vmatprep.subr.mxu0 0.0
        %1758 = vmatpush1.xpose.msra.mxu0 0.0
        %1759 = vmatprep.subr.mxu0 0.0
        %1760 = vmatpush1.xpose.msra.mxu0 0.0
        %1761 = vmatprep.subr.mxu0 0.0
        %1762 = vmatpush1.xpose.msra.mxu0 0.0
        %1763 = vmatprep.subr.mxu0 0.0
        %1764 = vmatpush1.xpose.msra.mxu0 0.0
        %1765 = vmatprep.subr.mxu0 0.0
        %1766 = vmatpush1.xpose.msra.mxu0 0.0
        %1767 = vmatprep.subr.mxu0 0.0
        %1768 = vmatpush1.xpose.msra.mxu0 0.0
        %1769 = vmatprep.subr.mxu0 0.0
        %1770 = vmatpush1.xpose.msra.mxu0 0.0
        %1771 = vmatprep.subr.mxu0 0.0
        %1772 = vmatpush1.xpose.msra.mxu0 0.0
        %1773 = vmatprep.subr.mxu0 0.0
        %1774 = vmatpush1.xpose.msra.mxu0 0.0
        %1775 = vmatprep.subr.mxu0 0.0
        %1776 = vmatpush1.xpose.msra.mxu0 0.0
        %1777 = vmatprep.mubr.f32.mxu0 0.0
        %1778 = vmatmul.mubr.f32.gmra.mrb[0].mxu0 %v1709
        %v1779 = vpop.f32.mrb[0].mxu0
        %v1780 = vadd.f32 0.0, %v1779
        %v1781 = vpop.f32.mrb[0].mxu0
        %1782 = vdwg.mxu0
        %v1783 = vsel %vm490, %v1780, -inf
        %1784 = vmax.xlane.f32.xlu0 %v1783
        %v1785 = vpop.xlane.xlu0 %1784
        %v1786 = vsub.f32 %v1780, %v1785
        %v1787 = vmul.f32 %v1786, 1.442695
        %v1788 = vpow.pop %v1787
        %v1789 = vsel %vm490, %v1788, 0.0
        %1790 = vadd.xlane.f32.xlu0 %v1789
        %v1791 = vpop.xlane.xlu0 %1790
        %v1792 = vrcp.pop %v1791
        %v1793 = vmul.f32 %v1788, %v1792
        %1794 = vrot.lane.b32.xlu0 %v1538, 56
        %v1795 = vpop.permute.xlu0 %1794
        %v1798 = vsel %vm490, %v1793, 0
        %1800 = vmatprep.subr.mxu0 0.0
        %1801 = vmatpush1.msra.mxu0 %v1795
        %1802 = vmatprep.subr.mxu0 0.0
        %1803 = vmatpush1.msra.mxu0 0.0
        %1804 = vmatprep.subr.mxu0 0.0
        %1805 = vmatpush1.msra.mxu0 0.0
        %1806 = vmatprep.subr.mxu0 0.0
        %1807 = vmatpush1.msra.mxu0 0.0
        %1808 = vmatprep.subr.mxu0 0.0
        %1809 = vmatpush1.msra.mxu0 0.0
        %1810 = vmatprep.subr.mxu0 0.0
        %1811 = vmatpush1.msra.mxu0 0.0
        %1812 = vmatprep.subr.mxu0 0.0
        %1813 = vmatpush1.msra.mxu0 0.0
        %1814 = vmatprep.subr.mxu0 0.0
        %1815 = vmatpush1.msra.mxu0 0.0
        %1816 = vmatprep.subr.mxu0 0.0
        %1817 = vmatpush1.msra.mxu0 0.0
        %1818 = vmatprep.subr.mxu0 0.0
        %1819 = vmatpush1.msra.mxu0 0.0
        %1820 = vmatprep.subr.mxu0 0.0
        %1821 = vmatpush1.msra.mxu0 0.0
        %1822 = vmatprep.subr.mxu0 0.0
        %1823 = vmatpush1.msra.mxu0 0.0
        %1824 = vmatprep.subr.mxu0 0.0
        %1825 = vmatpush1.msra.mxu0 0.0
        %1826 = vmatprep.subr.mxu0 0.0
        %1827 = vmatpush1.msra.mxu0 0.0
        %1828 = vmatprep.subr.mxu0 0.0
        %1829 = vmatpush1.msra.mxu0 0.0
        %1830 = vmatprep.subr.mxu0 0.0
        %1831 = vmatpush1.msra.mxu0 0.0
        %1832 = vmatprep.subr.mxu0 0.0
        %1833 = vmatpush1.msra.mxu0 0.0
        %1834 = vmatprep.subr.mxu0 0.0
        %1835 = vmatpush1.msra.mxu0 0.0
        %1836 = vmatprep.subr.mxu0 0.0
        %1837 = vmatpush1.msra.mxu0 0.0
        %1838 = vmatprep.subr.mxu0 0.0
        %1839 = vmatpush1.msra.mxu0 0.0
        %1840 = vmatprep.subr.mxu0 0.0
        %1841 = vmatpush1.msra.mxu0 0.0
        %1842 = vmatprep.subr.mxu0 0.0
        %1843 = vmatpush1.msra.mxu0 0.0
        %1844 = vmatprep.subr.mxu0 0.0
        %1845 = vmatpush1.msra.mxu0 0.0
        %1846 = vmatprep.subr.mxu0 0.0
        %1847 = vmatpush1.msra.mxu0 0.0
        %1848 = vmatprep.subr.mxu0 0.0
        %1849 = vmatpush1.msra.mxu0 0.0
        %1850 = vmatprep.subr.mxu0 0.0
        %1851 = vmatpush1.msra.mxu0 0.0
        %1852 = vmatprep.subr.mxu0 0.0
        %1853 = vmatpush1.msra.mxu0 0.0
        %1854 = vmatprep.subr.mxu0 0.0
        %1855 = vmatpush1.msra.mxu0 0.0
        %1856 = vmatprep.subr.mxu0 0.0
        %1857 = vmatpush1.msra.mxu0 0.0
        %1858 = vmatprep.subr.mxu0 0.0
        %1859 = vmatpush1.msra.mxu0 0.0
        %1860 = vmatprep.subr.mxu0 0.0
        %1861 = vmatpush1.msra.mxu0 0.0
        %1862 = vmatprep.subr.mxu0 0.0
        %1863 = vmatpush1.msra.mxu0 0.0
        %1864 = vmatprep.mubr.f32.mxu0 0.0
        %1865 = vmatmul.mubr.f32.gmra.mrb[0].mxu0 %v1798
        %v1866 = vpop.f32.mrb[0].mxu0
        %v1867 = vadd.f32 0.0, %v1866
        %v1868 = vpop.f32.mrb[0].mxu0
        %1869 = vdwg.mxu0
        %v1871 = vsel %vm490, %v1867, 0
        %1873 = vmatprep.subr.mxu0 0.0
        %1874 = vmatpush1.msra.mxu0 %v1457
        %1875 = vmatprep.subr.mxu0 0.0
        %1876 = vmatpush1.msra.mxu0 0.0
        %1877 = vmatprep.subr.mxu0 0.0
        %1878 = vmatpush1.msra.mxu0 0.0
        %1879 = vmatprep.subr.mxu0 0.0
        %1880 = vmatpush1.msra.mxu0 0.0
        %1881 = vmatprep.subr.mxu0 0.0
        %1882 = vmatpush1.msra.mxu0 0.0
        %1883 = vmatprep.subr.mxu0 0.0
        %1884 = vmatpush1.msra.mxu0 0.0
        %1885 = vmatprep.subr.mxu0 0.0
        %1886 = vmatpush1.msra.mxu0 0.0
        %1887 = vmatprep.subr.mxu0 0.0
        %1888 = vmatpush1.msra.mxu0 0.0
        %1889 = vmatprep.subr.mxu0 0.0
        %1890 = vmatpush1.msra.mxu0 0.0
        %1891 = vmatprep.subr.mxu0 0.0
        %1892 = vmatpush1.msra.mxu0 0.0
        %1893 = vmatprep.subr.mxu0 0.0
        %1894 = vmatpush1.msra.mxu0 0.0
        %1895 = vmatprep.subr.mxu0 0.0
        %1896 = vmatpush1.msra.mxu0 0.0
        %1897 = vmatprep.subr.mxu0 0.0
        %1898 = vmatpush1.msra.mxu0 0.0
        %1899 = vmatprep.subr.mxu0 0.0
        %1900 = vmatpush1.msra.mxu0 0.0
        %1901 = vmatprep.subr.mxu0 0.0
        %1902 = vmatpush1.msra.mxu0 0.0
        %1903 = vmatprep.subr.mxu0 0.0
        %1904 = vmatpush1.msra.mxu0 0.0
        %1905 = vmatprep.subr.mxu0 0.0
        %1906 = vmatpush1.msra.mxu0 0.0
        %1907 = vmatprep.subr.mxu0 0.0
        %1908 = vmatpush1.msra.mxu0 0.0
        %1909 = vmatprep.subr.mxu0 0.0
        %1910 = vmatpush1.msra.mxu0 0.0
        %1911 = vmatprep.subr.mxu0 0.0
        %1912 = vmatpush1.msra.mxu0 0.0
        %1913 = vmatprep.subr.mxu0 0.0
        %1914 = vmatpush1.msra.mxu0 0.0
        %1915 = vmatprep.subr.mxu0 0.0
        %1916 = vmatpush1.msra.mxu0 0.0
        %1917 = vmatprep.subr.mxu0 0.0
        %1918 = vmatpush1.msra.mxu0 0.0
        %1919 = vmatprep.subr.mxu0 0.0
        %1920 = vmatpush1.msra.mxu0 0.0
        %1921 = vmatprep.subr.mxu0 0.0
        %1922 = vmatpush1.msra.mxu0 0.0
        %1923 = vmatprep.subr.mxu0 0.0
        %1924 = vmatpush1.msra.mxu0 0.0
        %1925 = vmatprep.subr.mxu0 0.0
        %1926 = vmatpush1.msra.mxu0 0.0
        %1927 = vmatprep.subr.mxu0 0.0
        %1928 = vmatpush1.msra.mxu0 0.0
        %1929 = vmatprep.subr.mxu0 0.0
        %1930 = vmatpush1.msra.mxu0 0.0
        %1931 = vmatprep.subr.mxu0 0.0
        %1932 = vmatpush1.msra.mxu0 0.0
        %1933 = vmatprep.subr.mxu0 0.0
        %1934 = vmatpush1.msra.mxu0 0.0
        %1935 = vmatprep.subr.mxu0 0.0
        %1936 = vmatpush1.msra.mxu0 0.0
        %1937 = vmatprep.mubr.f32.mxu0 0.0
        %1938 = vmatmul.mubr.f32.gmra.mrb[0].mxu0 %v1871
        %v1939 = vpop.f32.mrb[0].mxu0
        %v1940 = vadd.f32 0.0, %v1939
        %v1941 = vpop.f32.mrb[0].mxu0
        %1942 = vdwg.mxu0
        %v1944 = vsel %vm490, %v1702, 0
        %1946 = vmatprep.subr.mxu0 0.0
        %1947 = vmatpush1.msra.mxu0 %v1456
        %1948 = vmatprep.subr.mxu0 0.0
        %1949 = vmatpush1.msra.mxu0 0.0
        %1950 = vmatprep.subr.mxu0 0.0
        %1951 = vmatpush1.msra.mxu0 0.0
        %1952 = vmatprep.subr.mxu0 0.0
        %1953 = vmatpush1.msra.mxu0 0.0
        %1954 = vmatprep.subr.mxu0 0.0
        %1955 = vmatpush1.msra.mxu0 0.0
        %1956 = vmatprep.subr.mxu0 0.0
        %1957 = vmatpush1.msra.mxu0 0.0
        %1958 = vmatprep.subr.mxu0 0.0
        %1959 = vmatpush1.msra.mxu0 0.0
        %1960 = vmatprep.subr.mxu0 0.0
        %1961 = vmatpush1.msra.mxu0 0.0
        %1962 = vmatprep.subr.mxu0 0.0
        %1963 = vmatpush1.msra.mxu0 0.0
        %1964 = vmatprep.subr.mxu0 0.0
        %1965 = vmatpush1.msra.mxu0 0.0
        %1966 = vmatprep.subr.mxu0 0.0
        %1967 = vmatpush1.msra.mxu0 0.0
        %1968 = vmatprep.subr.mxu0 0.0
        %1969 = vmatpush1.msra.mxu0 0.0
        %1970 = vmatprep.subr.mxu0 0.0
        %1971 = vmatpush1.msra.mxu0 0.0
        %1972 = vmatprep.subr.mxu0 0.0
        %1973 = vmatpush1.msra.mxu0 0.0
        %1974 = vmatprep.subr.mxu0 0.0
        %1975 = vmatpush1.msra.mxu0 0.0
        %1976 = vmatprep.subr.mxu0 0.0
        %1977 = vmatpush1.msra.mxu0 0.0
        %1978 = vmatprep.subr.mxu0 0.0
        %1979 = vmatpush1.msra.mxu0 0.0
        %1980 = vmatprep.subr.mxu0 0.0
        %1981 = vmatpush1.msra.mxu0 0.0
        %1982 = vmatprep.subr.mxu0 0.0
        %1983 = vmatpush1.msra.mxu0 0.0
        %1984 = vmatprep.subr.mxu0 0.0
        %1985 = vmatpush1.msra.mxu0 0.0
        %1986 = vmatprep.subr.mxu0 0.0
        %1987 = vmatpush1.msra.mxu0 0.0
        %1988 = vmatprep.subr.mxu0 0.0
        %1989 = vmatpush1.msra.mxu0 0.0
        %1990 = vmatprep.subr.mxu0 0.0
        %1991 = vmatpush1.msra.mxu0 0.0
        %1992 = vmatprep.subr.mxu0 0.0
        %1993 = vmatpush1.msra.mxu0 0.0
        %1994 = vmatprep.subr.mxu0 0.0
        %1995 = vmatpush1.msra.mxu0 0.0
        %1996 = vmatprep.subr.mxu0 0.0
        %1997 = vmatpush1.msra.mxu0 0.0
        %1998 = vmatprep.subr.mxu0 0.0
        %1999 = vmatpush1.msra.mxu0 0.0
        %2000 = vmatprep.subr.mxu0 0.0
        %2001 = vmatpush1.msra.mxu0 0.0
        %2002 = vmatprep.subr.mxu0 0.0
        %2003 = vmatpush1.msra.mxu0 0.0
        %2004 = vmatprep.subr.mxu0 0.0
        %2005 = vmatpush1.msra.mxu0 0.0
        %2006 = vmatprep.subr.mxu0 0.0
        %2007 = vmatpush1.msra.mxu0 0.0
        %2008 = vmatprep.subr.mxu0 0.0
        %2009 = vmatpush1.msra.mxu0 0.0
        %2010 = vmatprep.mubr.f32.mxu0 0.0
        %2011 = vmatmul.mubr.f32.gmra.mrb[0].mxu0 %v1944
        %v2012 = vpop.f32.mrb[0].mxu0
        %v2013 = vadd.f32 %v1940, %v2012
        %v2014 = vpop.f32.mrb[0].mxu0
        %2015 = vdwg.mxu0
        %2016 = vrot.lane.b32.xlu0 %v1538, 112
        %v2017 = vpop.permute.xlu0 %2016
        %2018 = vrot.lane.b32.xlu0 %v1538, 80
        %v2019 = vpop.permute.xlu0 %2018
        %v2020 = vsel %vm490, %v2017, 0
        %v2022 = vsel %vm490, %v2019, 0
        %2024 = vmatprep.subr.mxu0 0.0
        %2025 = vmatpush1.xpose.msra.mxu0 %v2022
        %2026 = vmatprep.subr.mxu0 0.0
        %2027 = vmatpush1.xpose.msra.mxu0 0.0
        %2028 = vmatprep.subr.mxu0 0.0
        %2029 = vmatpush1.xpose.msra.mxu0 0.0
        %2030 = vmatprep.subr.mxu0 0.0
        %2031 = vmatpush1.xpose.msra.mxu0 0.0
        %2032 = vmatprep.subr.mxu0 0.0
        %2033 = vmatpush1.xpose.msra.mxu0 0.0
        %2034 = vmatprep.subr.mxu0 0.0
        %2035 = vmatpush1.xpose.msra.mxu0 0.0
        %2036 = vmatprep.subr.mxu0 0.0
        %2037 = vmatpush1.xpose.msra.mxu0 0.0
        %2038 = vmatprep.subr.mxu0 0.0
        %2039 = vmatpush1.xpose.msra.mxu0 0.0
        %2040 = vmatprep.subr.mxu0 0.0
        %2041 = vmatpush1.xpose.msra.mxu0 0.0
        %2042 = vmatprep.subr.mxu0 0.0
        %2043 = vmatpush1.xpose.msra.mxu0 0.0
        %2044 = vmatprep.subr.mxu0 0.0
        %2045 = vmatpush1.xpose.msra.mxu0 0.0
        %2046 = vmatprep.subr.mxu0 0.0
        %2047 = vmatpush1.xpose.msra.mxu0 0.0
        %2048 = vmatprep.subr.mxu0 0.0
        %2049 = vmatpush1.xpose.msra.mxu0 0.0
        %2050 = vmatprep.subr.mxu0 0.0
        %2051 = vmatpush1.xpose.msra.mxu0 0.0
        %2052 = vmatprep.subr.mxu0 0.0
        %2053 = vmatpush1.xpose.msra.mxu0 0.0
        %2054 = vmatprep.subr.mxu0 0.0
        %2055 = vmatpush1.xpose.msra.mxu0 0.0
        %2056 = vmatprep.subr.mxu0 0.0
        %2057 = vmatpush1.xpose.msra.mxu0 0.0
        %2058 = vmatprep.subr.mxu0 0.0
        %2059 = vmatpush1.xpose.msra.mxu0 0.0
        %2060 = vmatprep.subr.mxu0 0.0
        %2061 = vmatpush1.xpose.msra.mxu0 0.0
        %2062 = vmatprep.subr.mxu0 0.0
        %2063 = vmatpush1.xpose.msra.mxu0 0.0
        %2064 = vmatprep.subr.mxu0 0.0
        %2065 = vmatpush1.xpose.msra.mxu0 0.0
        %2066 = vmatprep.subr.mxu0 0.0
        %2067 = vmatpush1.xpose.msra.mxu0 0.0
        %2068 = vmatprep.subr.mxu0 0.0
        %2069 = vmatpush1.xpose.msra.mxu0 0.0
        %2070 = vmatprep.subr.mxu0 0.0
        %2071 = vmatpush1.xpose.msra.mxu0 0.0
        %2072 = vmatprep.subr.mxu0 0.0
        %2073 = vmatpush1.xpose.msra.mxu0 0.0
        %2074 = vmatprep.subr.mxu0 0.0
        %2075 = vmatpush1.xpose.msra.mxu0 0.0
        %2076 = vmatprep.subr.mxu0 0.0
        %2077 = vmatpush1.xpose.msra.mxu0 0.0
        %2078 = vmatprep.subr.mxu0 0.0
        %2079 = vmatpush1.xpose.msra.mxu0 0.0
        %2080 = vmatprep.subr.mxu0 0.0
        %2081 = vmatpush1.xpose.msra.mxu0 0.0
        %2082 = vmatprep.subr.mxu0 0.0
        %2083 = vmatpush1.xpose.msra.mxu0 0.0
        %2084 = vmatprep.subr.mxu0 0.0
        %2085 = vmatpush1.xpose.msra.mxu0 0.0
        %2086 = vmatprep.subr.mxu0 0.0
        %2087 = vmatpush1.xpose.msra.mxu0 0.0
        %2088 = vmatprep.mubr.f32.mxu0 0.0
        %2089 = vmatmul.mubr.f32.gmra.mrb[0].mxu0 %v2020
        %v2090 = vpop.f32.mrb[0].mxu0
        %v2091 = vadd.f32 0.0, %v2090
        %v2092 = vpop.f32.mrb[0].mxu0
        %2093 = vdwg.mxu0
        %v2094 = vsel %vm490, %v2091, -inf
        %2095 = vmax.xlane.f32.xlu0 %v2094
        %v2096 = vpop.xlane.xlu0 %2095
        %v2097 = vsub.f32 %v2091, %v2096
        %v2098 = vmul.f32 %v2097, 1.442695
        %v2099 = vpow.pop %v2098
        %v2100 = vsel %vm490, %v2099, 0.0
        %2101 = vadd.xlane.f32.xlu0 %v2100
        %v2102 = vpop.xlane.xlu0 %2101
        %v2103 = vrcp.pop %v2102
        %v2104 = vmul.f32 %v2099, %v2103
        %2105 = vrot.lane.b32.xlu0 %v1538, 48
        %v2106 = vpop.permute.xlu0 %2105
        %v2109 = vsel %vm490, %v2104, 0
        %2111 = vmatprep.subr.mxu0 0.0
        %2112 = vmatpush1.msra.mxu0 %v2106
        %2113 = vmatprep.subr.mxu0 0.0
        %2114 = vmatpush1.msra.mxu0 0.0
        %2115 = vmatprep.subr.mxu0 0.0
        %2116 = vmatpush1.msra.mxu0 0.0
        %2117 = vmatprep.subr.mxu0 0.0
        %2118 = vmatpush1.msra.mxu0 0.0
        %2119 = vmatprep.subr.mxu0 0.0
        %2120 = vmatpush1.msra.mxu0 0.0
        %2121 = vmatprep.subr.mxu0 0.0
        %2122 = vmatpush1.msra.mxu0 0.0
        %2123 = vmatprep.subr.mxu0 0.0
        %2124 = vmatpush1.msra.mxu0 0.0
        %2125 = vmatprep.subr.mxu0 0.0
        %2126 = vmatpush1.msra.mxu0 0.0
        %2127 = vmatprep.subr.mxu0 0.0
        %2128 = vmatpush1.msra.mxu0 0.0
        %2129 = vmatprep.subr.mxu0 0.0
        %2130 = vmatpush1.msra.mxu0 0.0
        %2131 = vmatprep.subr.mxu0 0.0
        %2132 = vmatpush1.msra.mxu0 0.0
        %2133 = vmatprep.subr.mxu0 0.0
        %2134 = vmatpush1.msra.mxu0 0.0
        %2135 = vmatprep.subr.mxu0 0.0
        %2136 = vmatpush1.msra.mxu0 0.0
        %2137 = vmatprep.subr.mxu0 0.0
        %2138 = vmatpush1.msra.mxu0 0.0
        %2139 = vmatprep.subr.mxu0 0.0
        %2140 = vmatpush1.msra.mxu0 0.0
        %2141 = vmatprep.subr.mxu0 0.0
        %2142 = vmatpush1.msra.mxu0 0.0
        %2143 = vmatprep.subr.mxu0 0.0
        %2144 = vmatpush1.msra.mxu0 0.0
        %2145 = vmatprep.subr.mxu0 0.0
        %2146 = vmatpush1.msra.mxu0 0.0
        %2147 = vmatprep.subr.mxu0 0.0
        %2148 = vmatpush1.msra.mxu0 0.0
        %2149 = vmatprep.subr.mxu0 0.0
        %2150 = vmatpush1.msra.mxu0 0.0
        %2151 = vmatprep.subr.mxu0 0.0
        %2152 = vmatpush1.msra.mxu0 0.0
        %2153 = vmatprep.subr.mxu0 0.0
        %2154 = vmatpush1.msra.mxu0 0.0
        %2155 = vmatprep.subr.mxu0 0.0
        %2156 = vmatpush1.msra.mxu0 0.0
        %2157 = vmatprep.subr.mxu0 0.0
        %2158 = vmatpush1.msra.mxu0 0.0
        %2159 = vmatprep.subr.mxu0 0.0
        %2160 = vmatpush1.msra.mxu0 0.0
        %2161 = vmatprep.subr.mxu0 0.0
        %2162 = vmatpush1.msra.mxu0 0.0
        %2163 = vmatprep.subr.mxu0 0.0
        %2164 = vmatpush1.msra.mxu0 0.0
        %2165 = vmatprep.subr.mxu0 0.0
        %2166 = vmatpush1.msra.mxu0 0.0
        %2167 = vmatprep.subr.mxu0 0.0
        %2168 = vmatpush1.msra.mxu0 0.0
        %2169 = vmatprep.subr.mxu0 0.0
        %2170 = vmatpush1.msra.mxu0 0.0
        %2171 = vmatprep.subr.mxu0 0.0
        %2172 = vmatpush1.msra.mxu0 0.0
        %2173 = vmatprep.subr.mxu0 0.0
        %2174 = vmatpush1.msra.mxu0 0.0
        %2175 = vmatprep.mubr.f32.mxu0 0.0
        %2176 = vmatmul.mubr.f32.gmra.mrb[0].mxu0 %v2109
        %v2177 = vpop.f32.mrb[0].mxu0
        %v2178 = vadd.f32 0.0, %v2177
        %v2179 = vpop.f32.mrb[0].mxu0
        %2180 = vdwg.mxu0
        %v2182 = vsel %vm490, %v2178, 0
        %2184 = vmatprep.subr.mxu0 0.0
        %2185 = vmatpush1.msra.mxu0 %v1458
        %2186 = vmatprep.subr.mxu0 0.0
        %2187 = vmatpush1.msra.mxu0 0.0
        %2188 = vmatprep.subr.mxu0 0.0
        %2189 = vmatpush1.msra.mxu0 0.0
        %2190 = vmatprep.subr.mxu0 0.0
        %2191 = vmatpush1.msra.mxu0 0.0
        %2192 = vmatprep.subr.mxu0 0.0
        %2193 = vmatpush1.msra.mxu0 0.0
        %2194 = vmatprep.subr.mxu0 0.0
        %2195 = vmatpush1.msra.mxu0 0.0
        %2196 = vmatprep.subr.mxu0 0.0
        %2197 = vmatpush1.msra.mxu0 0.0
        %2198 = vmatprep.subr.mxu0 0.0
        %2199 = vmatpush1.msra.mxu0 0.0
        %2200 = vmatprep.subr.mxu0 0.0
        %2201 = vmatpush1.msra.mxu0 0.0
        %2202 = vmatprep.subr.mxu0 0.0
        %2203 = vmatpush1.msra.mxu0 0.0
        %2204 = vmatprep.subr.mxu0 0.0
        %2205 = vmatpush1.msra.mxu0 0.0
        %2206 = vmatprep.subr.mxu0 0.0
        %2207 = vmatpush1.msra.mxu0 0.0
        %2208 = vmatprep.subr.mxu0 0.0
        %2209 = vmatpush1.msra.mxu0 0.0
        %2210 = vmatprep.subr.mxu0 0.0
        %2211 = vmatpush1.msra.mxu0 0.0
        %2212 = vmatprep.subr.mxu0 0.0
        %2213 = vmatpush1.msra.mxu0 0.0
        %2214 = vmatprep.subr.mxu0 0.0
        %2215 = vmatpush1.msra.mxu0 0.0
        %2216 = vmatprep.subr.mxu0 0.0
        %2217 = vmatpush1.msra.mxu0 0.0
        %2218 = vmatprep.subr.mxu0 0.0
        %2219 = vmatpush1.msra.mxu0 0.0
        %2220 = vmatprep.subr.mxu0 0.0
        %2221 = vmatpush1.msra.mxu0 0.0
        %2222 = vmatprep.subr.mxu0 0.0
        %2223 = vmatpush1.msra.mxu0 0.0
        %2224 = vmatprep.subr.mxu0 0.0
        %2225 = vmatpush1.msra.mxu0 0.0
        %2226 = vmatprep.subr.mxu0 0.0
        %2227 = vmatpush1.msra.mxu0 0.0
        %2228 = vmatprep.subr.mxu0 0.0
        %2229 = vmatpush1.msra.mxu0 0.0
        %2230 = vmatprep.subr.mxu0 0.0
        %2231 = vmatpush1.msra.mxu0 0.0
        %2232 = vmatprep.subr.mxu0 0.0
        %2233 = vmatpush1.msra.mxu0 0.0
        %2234 = vmatprep.subr.mxu0 0.0
        %2235 = vmatpush1.msra.mxu0 0.0
        %2236 = vmatprep.subr.mxu0 0.0
        %2237 = vmatpush1.msra.mxu0 0.0
        %2238 = vmatprep.subr.mxu0 0.0
        %2239 = vmatpush1.msra.mxu0 0.0
        %2240 = vmatprep.subr.mxu0 0.0
        %2241 = vmatpush1.msra.mxu0 0.0
        %2242 = vmatprep.subr.mxu0 0.0
        %2243 = vmatpush1.msra.mxu0 0.0
        %2244 = vmatprep.subr.mxu0 0.0
        %2245 = vmatpush1.msra.mxu0 0.0
        %2246 = vmatprep.subr.mxu0 0.0
        %2247 = vmatpush1.msra.mxu0 0.0
        %2248 = vmatprep.mubr.f32.mxu0 0.0
        %2249 = vmatmul.mubr.f32.gmra.mrb[0].mxu0 %v2182
        %v2250 = vpop.f32.mrb[0].mxu0
        %v2251 = vadd.f32 0.0, %v2250
        %v2252 = vpop.f32.mrb[0].mxu0
        %2253 = vdwg.mxu0
        %v2254 = vadd.f32 %v2013, %v2251
        %2255 = vrot.lane.b32.xlu0 %v1538, 104
        %v2256 = vpop.permute.xlu0 %2255
        %2257 = vrot.lane.b32.xlu0 %v1538, 72
        %v2258 = vpop.permute.xlu0 %2257
        %v2259 = vsel %vm490, %v2256, 0
        %v2261 = vsel %vm490, %v2258, 0
        %2263 = vmatprep.subr.mxu0 0.0
        %2264 = vmatpush1.xpose.msra.mxu0 %v2261
        %2265 = vmatprep.subr.mxu0 0.0
        %2266 = vmatpush1.xpose.msra.mxu0 0.0
        %2267 = vmatprep.subr.mxu0 0.0
        %2268 = vmatpush1.xpose.msra.mxu0 0.0
        %2269 = vmatprep.subr.mxu0 0.0
        %2270 = vmatpush1.xpose.msra.mxu0 0.0
        %2271 = vmatprep.subr.mxu0 0.0
        %2272 = vmatpush1.xpose.msra.mxu0 0.0
        %2273 = vmatprep.subr.mxu0 0.0
        %2274 = vmatpush1.xpose.msra.mxu0 0.0
        %2275 = vmatprep.subr.mxu0 0.0
        %2276 = vmatpush1.xpose.msra.mxu0 0.0
        %2277 = vmatprep.subr.mxu0 0.0
        %2278 = vmatpush1.xpose.msra.mxu0 0.0
        %2279 = vmatprep.subr.mxu0 0.0
        %2280 = vmatpush1.xpose.msra.mxu0 0.0
        %2281 = vmatprep.subr.mxu0 0.0
        %2282 = vmatpush1.xpose.msra.mxu0 0.0
        %2283 = vmatprep.subr.mxu0 0.0
        %2284 = vmatpush1.xpose.msra.mxu0 0.0
        %2285 = vmatprep.subr.mxu0 0.0
        %2286 = vmatpush1.xpose.msra.mxu0 0.0
        %2287 = vmatprep.subr.mxu0 0.0
        %2288 = vmatpush1.xpose.msra.mxu0 0.0
        %2289 = vmatprep.subr.mxu0 0.0
        %2290 = vmatpush1.xpose.msra.mxu0 0.0
        %2291 = vmatprep.subr.mxu0 0.0
        %2292 = vmatpush1.xpose.msra.mxu0 0.0
        %2293 = vmatprep.subr.mxu0 0.0
        %2294 = vmatpush1.xpose.msra.mxu0 0.0
        %2295 = vmatprep.subr.mxu0 0.0
        %2296 = vmatpush1.xpose.msra.mxu0 0.0
        %2297 = vmatprep.subr.mxu0 0.0
        %2298 = vmatpush1.xpose.msra.mxu0 0.0
        %2299 = vmatprep.subr.mxu0 0.0
        %2300 = vmatpush1.xpose.msra.mxu0 0.0
        %2301 = vmatprep.subr.mxu0 0.0
        %2302 = vmatpush1.xpose.msra.mxu0 0.0
        %2303 = vmatprep.subr.mxu0 0.0
        %2304 = vmatpush1.xpose.msra.mxu0 0.0
        %2305 = vmatprep.subr.mxu0 0.0
        %2306 = vmatpush1.xpose.msra.mxu0 0.0
        %2307 = vmatprep.subr.mxu0 0.0
        %2308 = vmatpush1.xpose.msra.mxu0 0.0
        %2309 = vmatprep.subr.mxu0 0.0
        %2310 = vmatpush1.xpose.msra.mxu0 0.0
        %2311 = vmatprep.subr.mxu0 0.0
        %2312 = vmatpush1.xpose.msra.mxu0 0.0
        %2313 = vmatprep.subr.mxu0 0.0
        %2314 = vmatpush1.xpose.msra.mxu0 0.0
        %2315 = vmatprep.subr.mxu0 0.0
        %2316 = vmatpush1.xpose.msra.mxu0 0.0
        %2317 = vmatprep.subr.mxu0 0.0
        %2318 = vmatpush1.xpose.msra.mxu0 0.0
        %2319 = vmatprep.subr.mxu0 0.0
        %2320 = vmatpush1.xpose.msra.mxu0 0.0
        %2321 = vmatprep.subr.mxu0 0.0
        %2322 = vmatpush1.xpose.msra.mxu0 0.0
        %2323 = vmatprep.subr.mxu0 0.0
        %2324 = vmatpush1.xpose.msra.mxu0 0.0
        %2325 = vmatprep.subr.mxu0 0.0
        %2326 = vmatpush1.xpose.msra.mxu0 0.0
        %2327 = vmatprep.mubr.f32.mxu0 0.0
        %2328 = vmatmul.mubr.f32.gmra.mrb[0].mxu0 %v2259
        %v2329 = vpop.f32.mrb[0].mxu0
        %v2330 = vadd.f32 0.0, %v2329
        %v2331 = vpop.f32.mrb[0].mxu0
        %2332 = vdwg.mxu0
        %v2333 = vsel %vm490, %v2330, -inf
        %2334 = vmax.xlane.f32.xlu0 %v2333
        %v2335 = vpop.xlane.xlu0 %2334
        %v2336 = vsub.f32 %v2330, %v2335
        %v2337 = vmul.f32 %v2336, 1.442695
        %v2338 = vpow.pop %v2337
        %v2339 = vsel %vm490, %v2338, 0.0
        %2340 = vadd.xlane.f32.xlu0 %v2339
        %v2341 = vpop.xlane.xlu0 %2340
        %v2342 = vrcp.pop %v2341
        %v2343 = vmul.f32 %v2338, %v2342
        %2344 = vrot.lane.b32.xlu0 %v1538, 40
        %v2345 = vpop.permute.xlu0 %2344
        %v2348 = vsel %vm490, %v2343, 0
        %2350 = vmatprep.subr.mxu0 0.0
        %2351 = vmatpush1.msra.mxu0 %v2345
        %2352 = vmatprep.subr.mxu0 0.0
        %2353 = vmatpush1.msra.mxu0 0.0
        %2354 = vmatprep.subr.mxu0 0.0
        %2355 = vmatpush1.msra.mxu0 0.0
        %2356 = vmatprep.subr.mxu0 0.0
        %2357 = vmatpush1.msra.mxu0 0.0
        %2358 = vmatprep.subr.mxu0 0.0
        %2359 = vmatpush1.msra.mxu0 0.0
        %2360 = vmatprep.subr.mxu0 0.0
        %2361 = vmatpush1.msra.mxu0 0.0
        %2362 = vmatprep.subr.mxu0 0.0
        %2363 = vmatpush1.msra.mxu0 0.0
        %2364 = vmatprep.subr.mxu0 0.0
        %2365 = vmatpush1.msra.mxu0 0.0
        %2366 = vmatprep.subr.mxu0 0.0
        %2367 = vmatpush1.msra.mxu0 0.0
        %2368 = vmatprep.subr.mxu0 0.0
        %2369 = vmatpush1.msra.mxu0 0.0
        %2370 = vmatprep.subr.mxu0 0.0
        %2371 = vmatpush1.msra.mxu0 0.0
        %2372 = vmatprep.subr.mxu0 0.0
        %2373 = vmatpush1.msra.mxu0 0.0
        %2374 = vmatprep.subr.mxu0 0.0
        %2375 = vmatpush1.msra.mxu0 0.0
        %2376 = vmatprep.subr.mxu0 0.0
        %2377 = vmatpush1.msra.mxu0 0.0
        %2378 = vmatprep.subr.mxu0 0.0
        %2379 = vmatpush1.msra.mxu0 0.0
        %2380 = vmatprep.subr.mxu0 0.0
        %2381 = vmatpush1.msra.mxu0 0.0
        %2382 = vmatprep.subr.mxu0 0.0
        %2383 = vmatpush1.msra.mxu0 0.0
        %2384 = vmatprep.subr.mxu0 0.0
        %2385 = vmatpush1.msra.mxu0 0.0
        %2386 = vmatprep.subr.mxu0 0.0
        %2387 = vmatpush1.msra.mxu0 0.0
        %2388 = vmatprep.subr.mxu0 0.0
        %2389 = vmatpush1.msra.mxu0 0.0
        %2390 = vmatprep.subr.mxu0 0.0
        %2391 = vmatpush1.msra.mxu0 0.0
        %2392 = vmatprep.subr.mxu0 0.0
        %2393 = vmatpush1.msra.mxu0 0.0
        %2394 = vmatprep.subr.mxu0 0.0
        %2395 = vmatpush1.msra.mxu0 0.0
        %2396 = vmatprep.subr.mxu0 0.0
        %2397 = vmatpush1.msra.mxu0 0.0
        %2398 = vmatprep.subr.mxu0 0.0
        %2399 = vmatpush1.msra.mxu0 0.0
        %2400 = vmatprep.subr.mxu0 0.0
        %2401 = vmatpush1.msra.mxu0 0.0
        %2402 = vmatprep.subr.mxu0 0.0
        %2403 = vmatpush1.msra.mxu0 0.0
        %2404 = vmatprep.subr.mxu0 0.0
        %2405 = vmatpush1.msra.mxu0 0.0
        %2406 = vmatprep.subr.mxu0 0.0
        %2407 = vmatpush1.msra.mxu0 0.0
        %2408 = vmatprep.subr.mxu0 0.0
        %2409 = vmatpush1.msra.mxu0 0.0
        %2410 = vmatprep.subr.mxu0 0.0
        %2411 = vmatpush1.msra.mxu0 0.0
        %2412 = vmatprep.subr.mxu0 0.0
        %2413 = vmatpush1.msra.mxu0 0.0
        %2414 = vmatprep.mubr.f32.mxu0 0.0
        %2415 = vmatmul.mubr.f32.gmra.mrb[0].mxu0 %v2348
        %v2416 = vpop.f32.mrb[0].mxu0
        %v2417 = vadd.f32 0.0, %v2416
        %v2418 = vpop.f32.mrb[0].mxu0
        %2419 = vdwg.mxu0
        %v2421 = vsel %vm490, %v2417, 0
        %2423 = vmatprep.subr.mxu0 0.0
        %2424 = vmatpush1.msra.mxu0 %v1459
        %2425 = vmatprep.subr.mxu0 0.0
        %2426 = vmatpush1.msra.mxu0 0.0
        %2427 = vmatprep.subr.mxu0 0.0
        %2428 = vmatpush1.msra.mxu0 0.0
        %2429 = vmatprep.subr.mxu0 0.0
        %2430 = vmatpush1.msra.mxu0 0.0
        %2431 = vmatprep.subr.mxu0 0.0
        %2432 = vmatpush1.msra.mxu0 0.0
        %2433 = vmatprep.subr.mxu0 0.0
        %2434 = vmatpush1.msra.mxu0 0.0
        %2435 = vmatprep.subr.mxu0 0.0
        %2436 = vmatpush1.msra.mxu0 0.0
        %2437 = vmatprep.subr.mxu0 0.0
        %2438 = vmatpush1.msra.mxu0 0.0
        %2439 = vmatprep.subr.mxu0 0.0
        %2440 = vmatpush1.msra.mxu0 0.0
        %2441 = vmatprep.subr.mxu0 0.0
        %2442 = vmatpush1.msra.mxu0 0.0
        %2443 = vmatprep.subr.mxu0 0.0
        %2444 = vmatpush1.msra.mxu0 0.0
        %2445 = vmatprep.subr.mxu0 0.0
        %2446 = vmatpush1.msra.mxu0 0.0
        %2447 = vmatprep.subr.mxu0 0.0
        %2448 = vmatpush1.msra.mxu0 0.0
        %2449 = vmatprep.subr.mxu0 0.0
        %2450 = vmatpush1.msra.mxu0 0.0
        %2451 = vmatprep.subr.mxu0 0.0
        %2452 = vmatpush1.msra.mxu0 0.0
        %2453 = vmatprep.subr.mxu0 0.0
        %2454 = vmatpush1.msra.mxu0 0.0
        %2455 = vmatprep.subr.mxu0 0.0
        %2456 = vmatpush1.msra.mxu0 0.0
        %2457 = vmatprep.subr.mxu0 0.0
        %2458 = vmatpush1.msra.mxu0 0.0
        %2459 = vmatprep.subr.mxu0 0.0
        %2460 = vmatpush1.msra.mxu0 0.0
        %2461 = vmatprep.subr.mxu0 0.0
        %2462 = vmatpush1.msra.mxu0 0.0
        %2463 = vmatprep.subr.mxu0 0.0
        %2464 = vmatpush1.msra.mxu0 0.0
        %2465 = vmatprep.subr.mxu0 0.0
        %2466 = vmatpush1.msra.mxu0 0.0
        %2467 = vmatprep.subr.mxu0 0.0
        %2468 = vmatpush1.msra.mxu0 0.0
        %2469 = vmatprep.subr.mxu0 0.0
        %2470 = vmatpush1.msra.mxu0 0.0
        %2471 = vmatprep.subr.mxu0 0.0
        %2472 = vmatpush1.msra.mxu0 0.0
        %2473 = vmatprep.subr.mxu0 0.0
        %2474 = vmatpush1.msra.mxu0 0.0
        %2475 = vmatprep.subr.mxu0 0.0
        %2476 = vmatpush1.msra.mxu0 0.0
        %2477 = vmatprep.subr.mxu0 0.0
        %2478 = vmatpush1.msra.mxu0 0.0
        %2479 = vmatprep.subr.mxu0 0.0
        %2480 = vmatpush1.msra.mxu0 0.0
        %2481 = vmatprep.subr.mxu0 0.0
        %2482 = vmatpush1.msra.mxu0 0.0
        %2483 = vmatprep.subr.mxu0 0.0
        %2484 = vmatpush1.msra.mxu0 0.0
        %2485 = vmatprep.subr.mxu0 0.0
        %2486 = vmatpush1.msra.mxu0 0.0
        %2487 = vmatprep.mubr.f32.mxu0 0.0
        %2488 = vmatmul.mubr.f32.gmra.mrb[0].mxu0 %v2421
        %v2489 = vpop.f32.mrb[0].mxu0
        %v2490 = vadd.f32 0.0, %v2489
        %v2491 = vpop.f32.mrb[0].mxu0
        %2492 = vdwg.mxu0
        %v2493 = vadd.f32 %v2254, %v2490
        %v2495 = vlaneseq
        %v2496 = vshrl.u32 %v2495, 7
        %v2497 = vsub.s32 0, %v2496
        %v2498 = vrot.slane %v1461, %v2497
        %v2500 = vadd.f32 %v2493, %v2498
        %v2501 = vsel %vm413, %v2500, 0.0
        %2502 = vadd.xlane.f32.xlu0 %v2501
        %v2503 = vpop.xlane.xlu0 %2502
        %v2504 = vrcp.pop 32.0
        %v2505 = vmul.f32 %v2503, %v2504
        %v2506 = vsub.f32 %v2500, %v2505
        %v2507 = vmul.f32 %v2506, %v2506
        %v2508 = vsel %vm413, %v2507, 0.0
        %2509 = vadd.xlane.f32.xlu0 %v2508
        %v2510 = vpop.xlane.xlu0 %2509
        %v2511 = vmul.f32 %v2510, %v2504
        %v2512 = vadd.f32 %v2511, 1e-05
        %v2513 = vrsqrt.pop %v2512
        %v2514 = vmul.f32 %v2506, %v2513
        %v2515 = vld [vmem:[%s388] sm:$0x1]
        %v2517 = vlaneseq
        %v2518 = vshrl.u32 %v2517, 7
        %v2519 = vsub.s32 0, %v2518
        %v2520 = vrot.slane %v2515, %v2519
        %v2522 = vmul.f32 %v2514, %v2520
        %v2523 = vld [vmem:[%s391] sm:$0x1]
        %v2525 = vlaneseq
        %v2526 = vshrl.u32 %v2525, 7
        %v2527 = vsub.s32 0, %v2526
        %v2528 = vrot.slane %v2523, %v2527
        %v2530 = vadd.f32 %v2522, %v2528
        %2531 = vst.msk [vmem:[%s395] sm:$0xff] %vm413, %v2530
        %p2532 = scmp.lt.s32.totalorder %s21, 1
        %s2533 = scalar_select %p2532, %s21, 1
        %s2534 = smul.addr %s2533, 8
        %s2535 = scalar_lea.vmem %s7, %s2534
        // Predicated region
        $region53: #{random_walk_forward.1} parent=47 // pred_check
          %p2536 = pneg %p221
        $region54: #{random_walk_forward.1} parent=47 // pred_check_branch
          %2538 = sbr.rel (%p2536) target = $region56
        $region55: #{random_walk_forward.1} parent=47 // pred_region
          _
        $region56: #{random_walk_forward.1} parent=47 // pred_fallthru
          _
      $region48: #{random_walk_forward.1} parent=5 // pred_fallthru
        _
      %p2539 = scmp.le.s32.totalorder 2, %s16
      // Predicated region
      $region57: #{random_walk_forward.1} parent=5 // pred_check
        %p2540 = pneg %p2539
      $region58: #{random_walk_forward.1} parent=5 // pred_check_branch
        %2542 = sbr.rel (%p2540) target = $region60
      $region59: #{random_walk_forward.1} parent=5 // pred_region
        %s2543 = ssub.s32 %s16, 2
        // Predicated region
        $region61: #{random_walk_forward.1} parent=59 // pred_check
          %p2544 = pneg %p227
        $region62: #{random_walk_forward.1} parent=59 // pred_check_branch
          %2546 = sbr.rel (%p2544) target = $region64
        $region63: #{random_walk_forward.1} parent=59 // pred_region
          %p2547 = scmp.lt.s32.totalorder %s22, 1
          %s2548 = scalar_select %p2547, %s22, 1
          %s2549 = smul.addr %s2548, 8
          %s2550 = scalar_lea.vmem %s7, %s2549
        $region64: #{random_walk_forward.1} parent=59 // pred_fallthru
          _
      $region60: #{random_walk_forward.1} parent=5 // pred_fallthru
        _
    $region6: #{random_walk_forward.1} parent=1 // loop_footer
      %s20 = sadd.s32 1, %s16
    $region7: #{random_walk_forward.1} parent=1 // loop_footer_branch
      %15 = sbr.rel target = $region3
    $region8: #{random_walk_forward.1} parent=1 // loop_exit
      _
    %2551 = vsyncpa [#allocation3], 1
    %s2552 = scalar_lea.sflag [#allocation3], 1
    %2553 = vsyncpa %s2552, 1

</llo_original>
